<compile_context>
chip_gen: v7x
topology: tpu7x:2x2x1
jax: 0.10.0
libtpu: 0.0.40
codegen_flags: <defaults>
</compile_context>

<pallas_src>
from functools import partial

import numpy as np
import jax
import jax.numpy as jnp
from jax.experimental import pallas as pl
from jax.experimental.pallas import tpu as pltpu

NUM_HEADS = 8
LN_EPS = 1e-5
VMEM_LIMIT = 32 * 1024 * 1024   # fits v7x scoped VMEM; fine on v5e/v6e


# --------------------------- pass 1: fusion ----------------------------------
def _fusion_kernel(x1_ref, x2_ref,
                   w1_ref, b1_ref, w2_ref, b2_ref,
                   ow_ref, ob_ref, hpool_ref, hexp_ref,
                   fused_ref, stats_ref, *, B, C, tS):
    """One S-tile: fused conv+QKV, two cross-MHAs, merged out-proj, LN sums."""
    f32, bf16 = jnp.float32, jnp.bfloat16

    # Lane-concat the B batch slices -> one wide (N = B*tS) matmul per stream.
    x1 = jnp.concatenate([x1_ref[b] for b in range(B)], axis=-1)   # (C1, B*tS)
    x2 = jnp.concatenate([x2_ref[b] for b in range(B)], axis=-1)   # (C2, B*tS)

    # Fused 1x1-conv + QKV in-projection (conv folded in host-side, scale in q).
    p1 = (jnp.dot(w1_ref[...], x1, preferred_element_type=f32)
          + b1_ref[...]).astype(bf16)                              # (3C, B*tS)
    p2 = (jnp.dot(w2_ref[...], x2, preferred_element_type=f32)
          + b2_ref[...]).astype(bf16)
    # rows of p1: [ q(mha1) | k(mha2) | v(mha2) ]
    # rows of p2: [ q(mha2) | k(mha1) | v(mha1) ]
    q1, k2, v2 = p1[0:C], p1[C:2 * C], p1[2 * C:3 * C]
    q2, k1, v1 = p2[0:C], p2[C:2 * C], p2[2 * C:3 * C]

    hpool = hpool_ref[...]   # (H, C) bf16: sums the dh channels of each head
    hexp = hexp_ref[...]     # (C, H) bf16: broadcasts a head value to dh chans

    def lane(x, i):          # 128-aligned lane slice for batch element i
        return x[:, i * tS:(i + 1) * tS]

    def attend_one(qi, k, v):
        # Attention over the batch axis, independent per (spatial pos, head).
        s = [jnp.dot(hpool, qi * lane(k, j), preferred_element_type=f32)
             for j in range(B)]                                    # (H, tS) f32
        if B == 2:
            # softmax over 2 elems == sigmoid: one exp + one approx reciprocal
            t = jnp.exp(s[1] - s[0])
            p0 = pl.reciprocal(1.0 + t, approx=True)               # EUP slot
            p = [p0, 1.0 - p0]
        else:
            m = s[0]
            for j in range(1, B):
                m = jnp.maximum(m, s[j])
            e = [jnp.exp(sj - m) for sj in s]
            den = e[0]
            for j in range(1, B):
                den = den + e[j]
            inv = pl.reciprocal(den, approx=True)
            p = [ej * inv for ej in e]
        ctx = None
        for j in range(B):
            pj = jnp.dot(hexp, p[j].astype(bf16),
                         preferred_element_type=f32)               # (C, tS) f32
            term = pj * lane(v, j)
            ctx = term if ctx is None else ctx + term
        return ctx                                                 # (C, tS) f32

    ow = ow_ref[...]          # (C, 2C) bf16  = [ow1 | ow2]
    ob = ob_ref[...]          # (C, 1)  f32   = ob1 + ob2
    for b in range(B):
        ctx1 = attend_one(lane(q1, b), k1, v1)    # mha1: q from f1, k/v from f2
        ctx2 = attend_one(lane(q2, b), k2, v2)    # mha2: q from f2, k/v from f1
        cc = jnp.concatenate([ctx1, ctx2], axis=0).astype(bf16)    # (2C, tS)
        fb = jnp.dot(ow, cc, preferred_element_type=f32) + ob      # (C, tS) f32
        fused_ref[b] = fb.astype(fused_ref.dtype)                  # bf16 store
        # LN partial sums from the f32 accumulator (before the bf16 cast).
        stats_ref[0, 2 * b:2 * b + 1, :] = jnp.sum(fb, axis=0, keepdims=True)
        stats_ref[0, 2 * b + 1:2 * b + 2, :] = jnp.sum(fb * fb, axis=0,
                                                       keepdims=True)


# ------------------------- pass 2: LayerNorm apply ---------------------------
def _layernorm_kernel(f_ref, m_ref, r_ref, o_ref, *, B):
    # m_ref / r_ref are (B,) f32 scalars in SMEM.
    for b in range(B):
        o_ref[b] = (f_ref[b].astype(jnp.float32) - m_ref[b]) * r_ref[b]


# ------------------------------ wrapper ---------------------------------------
def _pick_tile(S, B):
    # Largest lane-dense tile (multiple of 128) dividing S such that the
    # in-kernel lane-batched width B*tS stays ~512 (bounds vreg pressure),
    # preferring >= 2 grid steps so pipelining / 2-TC sharding is exercised.
    cap = max(128, 512 // max(B, 1))
    cands = [t for t in (512, 256, 128) if t <= cap]
    for t in cands:
        if S % t == 0 and S // t >= 2:
            return t
    for t in cands:
        if S % t == 0:
            return t
    return S          # single-tile fallback (block dim equals array dim)


def _prepare_params(params, C):
    dh = C // NUM_HEADS
    scale = 1.0 / float(np.sqrt(dh))
    f32, bf16 = jnp.float32, jnp.bfloat16
    hi = jax.lax.Precision.HIGHEST

    cw1 = jnp.asarray(params['w1'], f32)                       # (C, C1)
    cw2 = jnp.asarray(params['w2'], f32)                       # (C, C2)
    cb1 = jnp.asarray(params['b1'], f32).reshape(-1, 1)        # (C, 1)
    cb2 = jnp.asarray(params['b2'], f32).reshape(-1, 1)

    in_w1 = jnp.asarray(params['in_w1'], f32)
    in_w2 = jnp.asarray(params['in_w2'], f32)
    in_b1 = jnp.asarray(params['in_b1'], f32).reshape(-1)
    in_b2 = jnp.asarray(params['in_b2'], f32).reshape(-1)
    wq1, wk1, wv1 = in_w1[:C], in_w1[C:2 * C], in_w1[2 * C:]
    wq2, wk2, wv2 = in_w2[:C], in_w2[C:2 * C], in_w2[2 * C:]
    bq1, bk1, bv1 = in_b1[:C], in_b1[C:2 * C], in_b1[2 * C:]
    bq2, bk2, bv2 = in_b2[:C], in_b2[C:2 * C], in_b2[2 * C:]

    # Per-stream fused QKV weights (both MHAs' projections on the same stream
    # concatenated; 1/sqrt(dh) folded into the q rows / bias).
    wp_f1 = jnp.concatenate([wq1 * scale, wk2, wv2], axis=0)   # (3C, C)
    bp_f1 = jnp.concatenate([bq1 * scale, bk2, bv2], axis=0).reshape(-1, 1)
    wp_f2 = jnp.concatenate([wq2 * scale, wk1, wv1], axis=0)
    bp_f2 = jnp.concatenate([bq2 * scale, bk1, bv1], axis=0).reshape(-1, 1)

    # Fold the 1x1 conv into the QKV projection (exact algebra, done in f32).
    w1p = jnp.matmul(wp_f1, cw1, precision=hi)                 # (3C, C1)
    b1p = jnp.matmul(wp_f1, cb1, precision=hi) + bp_f1         # (3C, 1)
    w2p = jnp.matmul(wp_f2, cw2, precision=hi)                 # (3C, C2)
    b2p = jnp.matmul(wp_f2, cb2, precision=hi) + bp_f2

    # Merged out-projection: a1 + a2 = [ow1 | ow2] @ [ctx1; ctx2] + (ob1+ob2).
    ow = jnp.concatenate([jnp.asarray(params['out_w1'], f32),
                          jnp.asarray(params['out_w2'], f32)], axis=1)  # (C, 2C)
    ob = (jnp.asarray(params['out_b1'], f32).reshape(-1, 1)
          + jnp.asarray(params['out_b2'], f32).reshape(-1, 1))          # (C, 1)

    hpool = jnp.repeat(jnp.eye(NUM_HEADS, dtype=f32), dh, axis=1)       # (H, C)

    return dict(w1=w1p.astype(bf16), b1=b1p,
                w2=w2p.astype(bf16), b2=b2p,
                ow=ow.astype(bf16), ob=ob,
                hpool=hpool.astype(bf16), hexp=hpool.T.astype(bf16))


def feature_fusion_forward(x1_nchw, x2_nchw, params, target_channels, target_size):
    B, C1, H, W = x1_nchw.shape
    B2, C2, H2, W2 = x2_nchw.shape
    assert B == B2
    assert (H, W) == tuple(target_size) and (H2, W2) == tuple(target_size), \
        "inputs must already be at target_size"
    # TODO(synk): bilinear-resize (F.interpolate) path of align_features is not implemented.
    C = target_channels
    assert C % NUM_HEADS == 0
    S = H * W
    tS = _pick_tile(S, B)
    n_tiles = S // tS

    p = _prepare_params(params, C)

    # Free reshapes only — no HBM transposes in the wrapper.
    x1 = x1_nchw.reshape(B, C1, S).astype(jnp.bfloat16)
    x2 = x2_nchw.reshape(B, C2, S).astype(jnp.bfloat16)

    def full(arr):
        return pl.BlockSpec(tuple(arr.shape), lambda i, _n=arr.ndim: (0,) * _n)

    def data_spec(cin):
        return pl.BlockSpec((B, cin, tS), lambda i: (0, 0, i))

    NH = NUM_HEADS
    flops = (2 * B * S * 3 * C * (C1 + C2)            # fused conv+QKV projections
             + 8 * B * B * S * NH * C                 # score + prob-expand dots
             + 2 * B * S * C * (2 * C))               # merged out-projection
    transcendentals = 2 * B * B * NH * S              # exp/reciprocal upper bound
    bytes_accessed = (2 * B * S * (C1 + C2)           # bf16 inputs
                      + 2 * B * S * C                 # bf16 fused write
                      + 8 * B * S)                    # f32 LN partial sums

    fused, stats = pl.pallas_call(
        partial(_fusion_kernel, B=B, C=C, tS=tS),
        grid=(n_tiles,),
        in_specs=[data_spec(C1), data_spec(C2),
                  full(p['w1']), full(p['b1']), full(p['w2']), full(p['b2']),
                  full(p['ow']), full(p['ob']),
                  full(p['hpool']), full(p['hexp'])],
        out_specs=(pl.BlockSpec((B, C, tS), lambda i: (0, 0, i)),
                   pl.BlockSpec((1, 2 * B, tS), lambda i: (i, 0, 0))),
        out_shape=(jax.ShapeDtypeStruct((B, C, S), jnp.bfloat16),
                   jax.ShapeDtypeStruct((n_tiles, 2 * B, tS), jnp.float32)),
        compiler_params=pltpu.CompilerParams(
            dimension_semantics=("parallel",),
            vmem_limit_bytes=VMEM_LIMIT),
        cost_estimate=pl.CostEstimate(flops=flops,
                                      transcendentals=transcendentals,
                                      bytes_accessed=bytes_accessed),
    )(x1, x2,
      p['w1'], p['b1'], p['w2'], p['b2'],
      p['ow'], p['ob'], p['hpool'], p['hexp'])

    # Tiny cross-tile reduction for the LayerNorm statistics (per batch elem).
    sums = jnp.sum(stats, axis=(0, 2))                   # (2B,)
    n = float(S * C)
    mean = sums[0::2] / n
    var = sums[1::2] / n - mean * mean                   # biased, like F.layer_norm
    invstd = jax.lax.rsqrt(var + LN_EPS)                 # (B,) f32 each

    out = pl.pallas_call(
        partial(_layernorm_kernel, B=B),
        grid=(n_tiles,),
        in_specs=[pl.BlockSpec((B, C, tS), lambda i: (0, 0, i)),
                  pl.BlockSpec(memory_space=pltpu.MemorySpace.SMEM),
                  pl.BlockSpec(memory_space=pltpu.MemorySpace.SMEM)],
        out_specs=pl.BlockSpec((B, C, tS), lambda i: (0, 0, i)),
        out_shape=jax.ShapeDtypeStruct((B, C, S), jnp.float32),
        compiler_params=pltpu.CompilerParams(
            dimension_semantics=("parallel",),
            vmem_limit_bytes=VMEM_LIMIT),
    )(fused, mean, invstd)

    return out.reshape(B, C, H, W)                       # free reshape


# ---------------- pure-JAX reference (for correctness check) -----------------
def reference_forward(x1, x2, params, C, target_size):
    B, _, H, W = x1.shape
    S = H * W

    def conv1x1(x, w, b):
        return jnp.einsum('bihw,oi->bohw', x, w) + b[0].reshape(1, -1, 1, 1)

    f1 = conv1x1(x1, params['w1'], params['b1'])
    f2 = conv1x1(x2, params['w2'], params['b2'])
    f1f = jnp.transpose(f1.reshape(B, C, S), (0, 2, 1))   # (L=B, N=S, E=C)
    f2f = jnp.transpose(f2.reshape(B, C, S), (0, 2, 1))

    def mha(q_in, kv_in, in_w, in_b, out_w, out_b):
        L, N, E = q_in.shape
        dh = E // NUM_HEADS
        wq, wk, wv = in_w[:E], in_w[E:2 * E], in_w[2 * E:]
        bq, bk, bv = in_b[0, :E], in_b[0, E:2 * E], in_b[0, 2 * E:]
        q = (q_in @ wq.T + bq).reshape(L, N, NUM_HEADS, dh)
        k = (kv_in @ wk.T + bk).reshape(L, N, NUM_HEADS, dh)
        v = (kv_in @ wv.T + bv).reshape(L, N, NUM_HEADS, dh)
        scores = jnp.einsum('inhd,jnhd->nhij', q, k) / jnp.sqrt(dh)
        p = jax.nn.softmax(scores, axis=-1)
        ctx = jnp.einsum('nhij,jnhd->inhd', p, v).reshape(L, N, E)
        return ctx @ out_w.T + out_b[0]

    a1 = mha(f1f, f2f, params['in_w1'], params['in_b1'],
             params['out_w1'], params['out_b1'])
    a2 = mha(f2f, f1f, params['in_w2'], params['in_b2'],
             params['out_w2'], params['out_b2'])
    fused = jnp.transpose(a1 + a2, (0, 2, 1)).reshape(B, C, H, W)
    mean = jnp.mean(fused, axis=(1, 2, 3), keepdims=True)
    var = jnp.mean((fused - mean) ** 2, axis=(1, 2, 3), keepdims=True)
    return (fused - mean) / jnp.sqrt(var + LN_EPS)


if __name__ == "__main__":
    key = jax.random.PRNGKey(0)
    B, C1, C2 = 2, 4, 6
    target_channels = 32            # divisible by num_heads = 8
    target_size = (16, 16)          # S = 256 -> tile 128, grid = (2,)
    H, W = target_size
    C = target_channels

    keys = jax.random.split(key, 16)

    def nrm(k, shape, scale=0.1):
        return (scale * jax.random.normal(k, shape)).astype(jnp.float32)

    params = {
        'w1': nrm(keys[0], (C, C1)),        'b1': nrm(keys[1], (1, C)),
        'w2': nrm(keys[2], (C, C2)),        'b2': nrm(keys[3], (1, C)),
        'in_w1': nrm(keys[4], (3 * C, C)),  'in_b1': nrm(keys[5], (1, 3 * C)),
        'out_w1': nrm(keys[6], (C, C)),     'out_b1': nrm(keys[7], (1, C)),
        'in_w2': nrm(keys[8], (3 * C, C)),  'in_b2': nrm(keys[9], (1, 3 * C)),
        'out_w2': nrm(keys[10], (C, C)),    'out_b2': nrm(keys[11], (1, C)),
    }
    x1 = nrm(keys[12], (B, C1, H, W), scale=1.0)
    x2 = nrm(keys[13], (B, C2, H, W), scale=1.0)

    out = feature_fusion_forward(x1, x2, params, target_channels, target_size)
    out = jax.block_until_ready(out)
    assert out.shape == (B, C, H, W)

    ref = reference_forward(x1, x2, params, C, target_size)
    # Matmul operands / the pre-LN intermediate run in bf16 on the MXU
    # (f32 accumulation, f32 LN statistics), so the check is relaxed from the
    # original f32-only 2e-3 tolerance.
    np.testing.assert_allclose(np.asarray(out), np.asarray(ref),
                               rtol=2e-2, atol=2e-2)
    print("KERNEL_OK")
</pallas_src>

<mosaic_0001>
module attributes {stable_mosaic.version = 11 : i64} {
  func.func @_fusion_kernel(%arg0: i32, %arg1: memref<2x4x128xbf16, #tpu.memory_space<vmem>>, %arg2: memref<2x6x128xbf16, #tpu.memory_space<vmem>>, %arg3: memref<96x4xbf16, #tpu.memory_space<vmem>>, %arg4: memref<96x1xf32, #tpu.memory_space<vmem>>, %arg5: memref<96x6xbf16, #tpu.memory_space<vmem>>, %arg6: memref<96x1xf32, #tpu.memory_space<vmem>>, %arg7: memref<32x64xbf16, #tpu.memory_space<vmem>>, %arg8: memref<32x1xf32, #tpu.memory_space<vmem>>, %arg9: memref<8x32xbf16, #tpu.memory_space<vmem>>, %arg10: memref<32x8xbf16, #tpu.memory_space<vmem>>, %arg11: memref<2x32x128xbf16, #tpu.memory_space<vmem>>, %arg12: memref<1x4x128xf32, #tpu.memory_space<vmem>>) attributes {dimension_semantics = [#tpu.dimension_semantics<parallel>], iteration_bounds = array<i64: 2>, scalar_prefetch = 0 : i64, scratch_operands = 0 : i64, tpu.core_type = #tpu.core_type<tc>, window_params = [{transform_indices = @transform_0, window_bounds = array<i64: 2, 4, 128>}, {transform_indices = @transform_1, window_bounds = array<i64: 2, 6, 128>}, {pipeline_mode = #tpu.pipeline_mode<synchronous>, transform_indices = @transform_2, window_bounds = array<i64: 96, 4>}, {pipeline_mode = #tpu.pipeline_mode<synchronous>, transform_indices = @transform_3, window_bounds = array<i64: 96, 1>}, {pipeline_mode = #tpu.pipeline_mode<synchronous>, transform_indices = @transform_4, window_bounds = array<i64: 96, 6>}, {pipeline_mode = #tpu.pipeline_mode<synchronous>, transform_indices = @transform_5, window_bounds = array<i64: 96, 1>}, {pipeline_mode = #tpu.pipeline_mode<synchronous>, transform_indices = @transform_6, window_bounds = array<i64: 32, 64>}, {pipeline_mode = #tpu.pipeline_mode<synchronous>, transform_indices = @transform_7, window_bounds = array<i64: 32, 1>}, {pipeline_mode = #tpu.pipeline_mode<synchronous>, transform_indices = @transform_8, window_bounds = array<i64: 8, 32>}, {pipeline_mode = #tpu.pipeline_mode<synchronous>, transform_indices = @transform_9, window_bounds = array<i64: 32, 8>}, {transform_indices = @transform_10, window_bounds = array<i64: 2, 32, 128>}, {transform_indices = @transform_11, window_bounds = array<i64: 1, 4, 128>}]} {
    %c0 = arith.constant 0 : index
    %c0_0 = arith.constant 0 : index
    %c0_1 = arith.constant 0 : index
    %0 = vector.load %arg1[%c0, %c0_0, %c0_1] : memref<2x4x128xbf16, #tpu.memory_space<vmem>>, vector<1x4x128xbf16>
    %1 = vector.shape_cast %0 : vector<1x4x128xbf16> to vector<4x128xbf16>
    %c1 = arith.constant 1 : index
    %c0_2 = arith.constant 0 : index
    %c0_3 = arith.constant 0 : index
    %2 = vector.load %arg1[%c1, %c0_2, %c0_3] : memref<2x4x128xbf16, #tpu.memory_space<vmem>>, vector<1x4x128xbf16>
    %3 = vector.shape_cast %2 : vector<1x4x128xbf16> to vector<4x128xbf16>
    %4 = tpu.concatenate %1, %3 in 1 : vector<4x128xbf16>, vector<4x128xbf16> -> vector<4x256xbf16>
    %c0_4 = arith.constant 0 : index
    %c0_5 = arith.constant 0 : index
    %c0_6 = arith.constant 0 : index
    %5 = vector.load %arg2[%c0_4, %c0_5, %c0_6] : memref<2x6x128xbf16, #tpu.memory_space<vmem>>, vector<1x6x128xbf16>
    %6 = vector.shape_cast %5 : vector<1x6x128xbf16> to vector<6x128xbf16>
    %c1_7 = arith.constant 1 : index
    %c0_8 = arith.constant 0 : index
    %c0_9 = arith.constant 0 : index
    %7 = vector.load %arg2[%c1_7, %c0_8, %c0_9] : memref<2x6x128xbf16, #tpu.memory_space<vmem>>, vector<1x6x128xbf16>
    %8 = vector.shape_cast %7 : vector<1x6x128xbf16> to vector<6x128xbf16>
    %9 = tpu.concatenate %6, %8 in 1 : vector<6x128xbf16>, vector<6x128xbf16> -> vector<6x256xbf16>
    %c0_10 = arith.constant 0 : index
    %c0_11 = arith.constant 0 : index
    %10 = vector.load %arg3[%c0_10, %c0_11] : memref<96x4xbf16, #tpu.memory_space<vmem>>, vector<96x4xbf16>
    %cst = arith.constant dense<0.000000e+00> : vector<96x256xf32>
    %11 = tpu.matmul %10, %4, %cst {dimension_numbers = #tpu.dot_dimension_numbers<[1], [0], [0], [1], [0, 0, 1, 1], [], []>} : vector<96x4xbf16>, vector<4x256xbf16>, vector<96x256xf32> -> vector<96x256xf32>
    %c0_12 = arith.constant 0 : index
    %c0_13 = arith.constant 0 : index
    %12 = vector.load %arg4[%c0_12, %c0_13] : memref<96x1xf32, #tpu.memory_space<vmem>>, vector<96x1xf32>
    %13 = vector.broadcast %12 : vector<96x1xf32> to vector<96x256xf32>
    %14 = arith.addf %11, %13 : vector<96x256xf32>
    %15 = arith.truncf %14 : vector<96x256xf32> to vector<96x256xbf16>
    %c0_14 = arith.constant 0 : index
    %c0_15 = arith.constant 0 : index
    %16 = vector.load %arg5[%c0_14, %c0_15] : memref<96x6xbf16, #tpu.memory_space<vmem>>, vector<96x6xbf16>
    %cst_16 = arith.constant dense<0.000000e+00> : vector<96x256xf32>
    %17 = tpu.matmul %16, %9, %cst_16 {dimension_numbers = #tpu.dot_dimension_numbers<[1], [0], [0], [1], [0, 0, 1, 1], [], []>} : vector<96x6xbf16>, vector<6x256xbf16>, vector<96x256xf32> -> vector<96x256xf32>
    %c0_17 = arith.constant 0 : index
    %c0_18 = arith.constant 0 : index
    %18 = vector.load %arg6[%c0_17, %c0_18] : memref<96x1xf32, #tpu.memory_space<vmem>>, vector<96x1xf32>
    %19 = vector.broadcast %18 : vector<96x1xf32> to vector<96x256xf32>
    %20 = arith.addf %17, %19 : vector<96x256xf32>
    %21 = arith.truncf %20 : vector<96x256xf32> to vector<96x256xbf16>
    %22 = vector.extract_strided_slice %15 {offsets = [0, 0], sizes = [32, 256], strides = [1, 1]} : vector<96x256xbf16> to vector<32x256xbf16>
    %23 = vector.extract_strided_slice %15 {offsets = [32, 0], sizes = [32, 256], strides = [1, 1]} : vector<96x256xbf16> to vector<32x256xbf16>
    %24 = vector.extract_strided_slice %15 {offsets = [64, 0], sizes = [32, 256], strides = [1, 1]} : vector<96x256xbf16> to vector<32x256xbf16>
    %25 = vector.extract_strided_slice %21 {offsets = [0, 0], sizes = [32, 256], strides = [1, 1]} : vector<96x256xbf16> to vector<32x256xbf16>
    %26 = vector.extract_strided_slice %21 {offsets = [32, 0], sizes = [32, 256], strides = [1, 1]} : vector<96x256xbf16> to vector<32x256xbf16>
    %27 = vector.extract_strided_slice %21 {offsets = [64, 0], sizes = [32, 256], strides = [1, 1]} : vector<96x256xbf16> to vector<32x256xbf16>
    %c0_19 = arith.constant 0 : index
    %c0_20 = arith.constant 0 : index
    %28 = vector.load %arg9[%c0_19, %c0_20] : memref<8x32xbf16, #tpu.memory_space<vmem>>, vector<8x32xbf16>
    %c0_21 = arith.constant 0 : index
    %c0_22 = arith.constant 0 : index
    %29 = vector.load %arg10[%c0_21, %c0_22] : memref<32x8xbf16, #tpu.memory_space<vmem>>, vector<32x8xbf16>
    %c0_23 = arith.constant 0 : index
    %c0_24 = arith.constant 0 : index
    %30 = vector.load %arg7[%c0_23, %c0_24] : memref<32x64xbf16, #tpu.memory_space<vmem>>, vector<32x64xbf16>
    %c0_25 = arith.constant 0 : index
    %c0_26 = arith.constant 0 : index
    %31 = vector.load %arg8[%c0_25, %c0_26] : memref<32x1xf32, #tpu.memory_space<vmem>>, vector<32x1xf32>
    %32 = vector.extract_strided_slice %22 {offsets = [0, 0], sizes = [32, 128], strides = [1, 1]} : vector<32x256xbf16> to vector<32x128xbf16>
    %33 = vector.extract_strided_slice %26 {offsets = [0, 0], sizes = [32, 128], strides = [1, 1]} : vector<32x256xbf16> to vector<32x128xbf16>
    %34 = arith.mulf %32, %33 : vector<32x128xbf16>
    %cst_27 = arith.constant dense<0.000000e+00> : vector<8x128xf32>
    %35 = tpu.matmul %28, %34, %cst_27 {dimension_numbers = #tpu.dot_dimension_numbers<[1], [0], [0], [1], [0, 0, 1, 1], [], []>} : vector<8x32xbf16>, vector<32x128xbf16>, vector<8x128xf32> -> vector<8x128xf32>
    %36 = vector.extract_strided_slice %26 {offsets = [0, 128], sizes = [32, 128], strides = [1, 1]} : vector<32x256xbf16> to vector<32x128xbf16>
    %37 = arith.mulf %32, %36 : vector<32x128xbf16>
    %cst_28 = arith.constant dense<0.000000e+00> : vector<8x128xf32>
    %38 = tpu.matmul %28, %37, %cst_28 {dimension_numbers = #tpu.dot_dimension_numbers<[1], [0], [0], [1], [0, 0, 1, 1], [], []>} : vector<8x32xbf16>, vector<32x128xbf16>, vector<8x128xf32> -> vector<8x128xf32>
    %39 = arith.subf %38, %35 : vector<8x128xf32>
    %40 = math.exp %39 : vector<8x128xf32>
    %cst_29 = arith.constant 1.000000e+00 : f32
    %41 = vector.broadcast %cst_29 : f32 to vector<8x128xf32>
    %42 = arith.addf %41, %40 : vector<8x128xf32>
    %43 = tpu.reciprocal %42 {approx = true} : vector<8x128xf32> -> vector<8x128xf32>
    %cst_30 = arith.constant 1.000000e+00 : f32
    %44 = vector.broadcast %cst_30 : f32 to vector<8x128xf32>
    %45 = arith.subf %44, %43 : vector<8x128xf32>
    %46 = arith.truncf %43 : vector<8x128xf32> to vector<8x128xbf16>
    %cst_31 = arith.constant dense<0.000000e+00> : vector<32x128xf32>
    %47 = tpu.matmul %29, %46, %cst_31 {dimension_numbers = #tpu.dot_dimension_numbers<[1], [0], [0], [1], [0, 0, 1, 1], [], []>} : vector<32x8xbf16>, vector<8x128xbf16>, vector<32x128xf32> -> vector<32x128xf32>
    %48 = vector.extract_strided_slice %27 {offsets = [0, 0], sizes = [32, 128], strides = [1, 1]} : vector<32x256xbf16> to vector<32x128xbf16>
    %49 = arith.extf %48 : vector<32x128xbf16> to vector<32x128xf32>
    %50 = arith.mulf %47, %49 : vector<32x128xf32>
    %51 = arith.truncf %45 : vector<8x128xf32> to vector<8x128xbf16>
    %cst_32 = arith.constant dense<0.000000e+00> : vector<32x128xf32>
    %52 = tpu.matmul %29, %51, %cst_32 {dimension_numbers = #tpu.dot_dimension_numbers<[1], [0], [0], [1], [0, 0, 1, 1], [], []>} : vector<32x8xbf16>, vector<8x128xbf16>, vector<32x128xf32> -> vector<32x128xf32>
    %53 = vector.extract_strided_slice %27 {offsets = [0, 128], sizes = [32, 128], strides = [1, 1]} : vector<32x256xbf16> to vector<32x128xbf16>
    %54 = arith.extf %53 : vector<32x128xbf16> to vector<32x128xf32>
    %55 = arith.mulf %52, %54 : vector<32x128xf32>
    %56 = arith.addf %50, %55 : vector<32x128xf32>
    %57 = vector.extract_strided_slice %25 {offsets = [0, 0], sizes = [32, 128], strides = [1, 1]} : vector<32x256xbf16> to vector<32x128xbf16>
    %58 = vector.extract_strided_slice %23 {offsets = [0, 0], sizes = [32, 128], strides = [1, 1]} : vector<32x256xbf16> to vector<32x128xbf16>
    %59 = arith.mulf %57, %58 : vector<32x128xbf16>
    %cst_33 = arith.constant dense<0.000000e+00> : vector<8x128xf32>
    %60 = tpu.matmul %28, %59, %cst_33 {dimension_numbers = #tpu.dot_dimension_numbers<[1], [0], [0], [1], [0, 0, 1, 1], [], []>} : vector<8x32xbf16>, vector<32x128xbf16>, vector<8x128xf32> -> vector<8x128xf32>
    %61 = vector.extract_strided_slice %23 {offsets = [0, 128], sizes = [32, 128], strides = [1, 1]} : vector<32x256xbf16> to vector<32x128xbf16>
    %62 = arith.mulf %57, %61 : vector<32x128xbf16>
    %cst_34 = arith.constant dense<0.000000e+00> : vector<8x128xf32>
    %63 = tpu.matmul %28, %62, %cst_34 {dimension_numbers = #tpu.dot_dimension_numbers<[1], [0], [0], [1], [0, 0, 1, 1], [], []>} : vector<8x32xbf16>, vector<32x128xbf16>, vector<8x128xf32> -> vector<8x128xf32>
    %64 = arith.subf %63, %60 : vector<8x128xf32>
    %65 = math.exp %64 : vector<8x128xf32>
    %cst_35 = arith.constant 1.000000e+00 : f32
    %66 = vector.broadcast %cst_35 : f32 to vector<8x128xf32>
    %67 = arith.addf %66, %65 : vector<8x128xf32>
    %68 = tpu.reciprocal %67 {approx = true} : vector<8x128xf32> -> vector<8x128xf32>
    %cst_36 = arith.constant 1.000000e+00 : f32
    %69 = vector.broadcast %cst_36 : f32 to vector<8x128xf32>
    %70 = arith.subf %69, %68 : vector<8x128xf32>
    %71 = arith.truncf %68 : vector<8x128xf32> to vector<8x128xbf16>
    %cst_37 = arith.constant dense<0.000000e+00> : vector<32x128xf32>
    %72 = tpu.matmul %29, %71, %cst_37 {dimension_numbers = #tpu.dot_dimension_numbers<[1], [0], [0], [1], [0, 0, 1, 1], [], []>} : vector<32x8xbf16>, vector<8x128xbf16>, vector<32x128xf32> -> vector<32x128xf32>
    %73 = vector.extract_strided_slice %24 {offsets = [0, 0], sizes = [32, 128], strides = [1, 1]} : vector<32x256xbf16> to vector<32x128xbf16>
    %74 = arith.extf %73 : vector<32x128xbf16> to vector<32x128xf32>
    %75 = arith.mulf %72, %74 : vector<32x128xf32>
    %76 = arith.truncf %70 : vector<8x128xf32> to vector<8x128xbf16>
    %cst_38 = arith.constant dense<0.000000e+00> : vector<32x128xf32>
    %77 = tpu.matmul %29, %76, %cst_38 {dimension_numbers = #tpu.dot_dimension_numbers<[1], [0], [0], [1], [0, 0, 1, 1], [], []>} : vector<32x8xbf16>, vector<8x128xbf16>, vector<32x128xf32> -> vector<32x128xf32>
    %78 = vector.extract_strided_slice %24 {offsets = [0, 128], sizes = [32, 128], strides = [1, 1]} : vector<32x256xbf16> to vector<32x128xbf16>
    %79 = arith.extf %78 : vector<32x128xbf16> to vector<32x128xf32>
    %80 = arith.mulf %77, %79 : vector<32x128xf32>
    %81 = arith.addf %75, %80 : vector<32x128xf32>
    %82 = tpu.concatenate %56, %81 in 0 : vector<32x128xf32>, vector<32x128xf32> -> vector<64x128xf32>
    %83 = arith.truncf %82 : vector<64x128xf32> to vector<64x128xbf16>
    %cst_39 = arith.constant dense<0.000000e+00> : vector<32x128xf32>
    %84 = tpu.matmul %30, %83, %cst_39 {dimension_numbers = #tpu.dot_dimension_numbers<[1], [0], [0], [1], [0, 0, 1, 1], [], []>} : vector<32x64xbf16>, vector<64x128xbf16>, vector<32x128xf32> -> vector<32x128xf32>
    %85 = vector.broadcast %31 : vector<32x1xf32> to vector<32x128xf32>
    %86 = arith.addf %84, %85 : vector<32x128xf32>
    %87 = arith.truncf %86 : vector<32x128xf32> to vector<32x128xbf16>
    %c0_40 = arith.constant 0 : index
    %c0_41 = arith.constant 0 : index
    %c0_42 = arith.constant 0 : index
    %88 = vector.load %arg11[%c0_40, %c0_41, %c0_42] : memref<2x32x128xbf16, #tpu.memory_space<vmem>>, vector<1x32x128xbf16>
    %89 = vector.shape_cast %88 : vector<1x32x128xbf16> to vector<32x128xbf16>
    %90 = vector.shape_cast %87 : vector<32x128xbf16> to vector<1x32x128xbf16>
    tpu.vector_store %arg11[%c0_40, %c0_41, %c0_42], %90 {strides = array<i32>} : memref<2x32x128xbf16, #tpu.memory_space<vmem>>, vector<1x32x128xbf16>,
    %cst_43 = arith.constant dense<0.000000e+00> : vector<128xf32>
    %91 = vector.multi_reduction <add>, %86, %cst_43 [0] : vector<32x128xf32> to vector<128xf32>
    %92 = vector.shape_cast %91 : vector<128xf32> to vector<1x128xf32>
    %c0_44 = arith.constant 0 : index
    %c0_45 = arith.constant 0 : index
    %c0_46 = arith.constant 0 : index
    %93 = vector.load %arg12[%c0_44, %c0_45, %c0_46] : memref<1x4x128xf32, #tpu.memory_space<vmem>>, vector<1x1x128xf32>
    %94 = vector.shape_cast %93 : vector<1x1x128xf32> to vector<1x128xf32>
    %95 = vector.shape_cast %92 : vector<1x128xf32> to vector<1x1x128xf32>
    tpu.vector_store %arg12[%c0_44, %c0_45, %c0_46], %95 {strides = array<i32>} : memref<1x4x128xf32, #tpu.memory_space<vmem>>, vector<1x1x128xf32>,
    %96 = arith.mulf %86, %86 : vector<32x128xf32>
    %cst_47 = arith.constant dense<0.000000e+00> : vector<128xf32>
    %97 = vector.multi_reduction <add>, %96, %cst_47 [0] : vector<32x128xf32> to vector<128xf32>
    %98 = vector.shape_cast %97 : vector<128xf32> to vector<1x128xf32>
    %c0_48 = arith.constant 0 : index
    %c1_49 = arith.constant 1 : index
    %c0_50 = arith.constant 0 : index
    %99 = vector.load %arg12[%c0_48, %c1_49, %c0_50] : memref<1x4x128xf32, #tpu.memory_space<vmem>>, vector<1x1x128xf32>
    %100 = vector.shape_cast %99 : vector<1x1x128xf32> to vector<1x128xf32>
    %101 = vector.shape_cast %98 : vector<1x128xf32> to vector<1x1x128xf32>
    tpu.vector_store %arg12[%c0_48, %c1_49, %c0_50], %101 {strides = array<i32>} : memref<1x4x128xf32, #tpu.memory_space<vmem>>, vector<1x1x128xf32>,
    %102 = vector.extract_strided_slice %22 {offsets = [0, 128], sizes = [32, 128], strides = [1, 1]} : vector<32x256xbf16> to vector<32x128xbf16>
    %103 = vector.extract_strided_slice %26 {offsets = [0, 0], sizes = [32, 128], strides = [1, 1]} : vector<32x256xbf16> to vector<32x128xbf16>
    %104 = arith.mulf %102, %103 : vector<32x128xbf16>
    %cst_51 = arith.constant dense<0.000000e+00> : vector<8x128xf32>
    %105 = tpu.matmul %28, %104, %cst_51 {dimension_numbers = #tpu.dot_dimension_numbers<[1], [0], [0], [1], [0, 0, 1, 1], [], []>} : vector<8x32xbf16>, vector<32x128xbf16>, vector<8x128xf32> -> vector<8x128xf32>
    %106 = vector.extract_strided_slice %26 {offsets = [0, 128], sizes = [32, 128], strides = [1, 1]} : vector<32x256xbf16> to vector<32x128xbf16>
    %107 = arith.mulf %102, %106 : vector<32x128xbf16>
    %cst_52 = arith.constant dense<0.000000e+00> : vector<8x128xf32>
    %108 = tpu.matmul %28, %107, %cst_52 {dimension_numbers = #tpu.dot_dimension_numbers<[1], [0], [0], [1], [0, 0, 1, 1], [], []>} : vector<8x32xbf16>, vector<32x128xbf16>, vector<8x128xf32> -> vector<8x128xf32>
    %109 = arith.subf %108, %105 : vector<8x128xf32>
    %110 = math.exp %109 : vector<8x128xf32>
    %cst_53 = arith.constant 1.000000e+00 : f32
    %111 = vector.broadcast %cst_53 : f32 to vector<8x128xf32>
    %112 = arith.addf %111, %110 : vector<8x128xf32>
    %113 = tpu.reciprocal %112 {approx = true} : vector<8x128xf32> -> vector<8x128xf32>
    %cst_54 = arith.constant 1.000000e+00 : f32
    %114 = vector.broadcast %cst_54 : f32 to vector<8x128xf32>
    %115 = arith.subf %114, %113 : vector<8x128xf32>
    %116 = arith.truncf %113 : vector<8x128xf32> to vector<8x128xbf16>
    %cst_55 = arith.constant dense<0.000000e+00> : vector<32x128xf32>
    %117 = tpu.matmul %29, %116, %cst_55 {dimension_numbers = #tpu.dot_dimension_numbers<[1], [0], [0], [1], [0, 0, 1, 1], [], []>} : vector<32x8xbf16>, vector<8x128xbf16>, vector<32x128xf32> -> vector<32x128xf32>
    %118 = vector.extract_strided_slice %27 {offsets = [0, 0], sizes = [32, 128], strides = [1, 1]} : vector<32x256xbf16> to vector<32x128xbf16>
    %119 = arith.extf %118 : vector<32x128xbf16> to vector<32x128xf32>
    %120 = arith.mulf %117, %119 : vector<32x128xf32>
    %121 = arith.truncf %115 : vector<8x128xf32> to vector<8x128xbf16>
    %cst_56 = arith.constant dense<0.000000e+00> : vector<32x128xf32>
    %122 = tpu.matmul %29, %121, %cst_56 {dimension_numbers = #tpu.dot_dimension_numbers<[1], [0], [0], [1], [0, 0, 1, 1], [], []>} : vector<32x8xbf16>, vector<8x128xbf16>, vector<32x128xf32> -> vector<32x128xf32>
    %123 = vector.extract_strided_slice %27 {offsets = [0, 128], sizes = [32, 128], strides = [1, 1]} : vector<32x256xbf16> to vector<32x128xbf16>
    %124 = arith.extf %123 : vector<32x128xbf16> to vector<32x128xf32>
    %125 = arith.mulf %122, %124 : vector<32x128xf32>
    %126 = arith.addf %120, %125 : vector<32x128xf32>
    %127 = vector.extract_strided_slice %25 {offsets = [0, 128], sizes = [32, 128], strides = [1, 1]} : vector<32x256xbf16> to vector<32x128xbf16>
    %128 = vector.extract_strided_slice %23 {offsets = [0, 0], sizes = [32, 128], strides = [1, 1]} : vector<32x256xbf16> to vector<32x128xbf16>
    %129 = arith.mulf %127, %128 : vector<32x128xbf16>
    %cst_57 = arith.constant dense<0.000000e+00> : vector<8x128xf32>
    %130 = tpu.matmul %28, %129, %cst_57 {dimension_numbers = #tpu.dot_dimension_numbers<[1], [0], [0], [1], [0, 0, 1, 1], [], []>} : vector<8x32xbf16>, vector<32x128xbf16>, vector<8x128xf32> -> vector<8x128xf32>
    %131 = vector.extract_strided_slice %23 {offsets = [0, 128], sizes = [32, 128], strides = [1, 1]} : vector<32x256xbf16> to vector<32x128xbf16>
    %132 = arith.mulf %127, %131 : vector<32x128xbf16>
    %cst_58 = arith.constant dense<0.000000e+00> : vector<8x128xf32>
    %133 = tpu.matmul %28, %132, %cst_58 {dimension_numbers = #tpu.dot_dimension_numbers<[1], [0], [0], [1], [0, 0, 1, 1], [], []>} : vector<8x32xbf16>, vector<32x128xbf16>, vector<8x128xf32> -> vector<8x128xf32>
    %134 = arith.subf %133, %130 : vector<8x128xf32>
    %135 = math.exp %134 : vector<8x128xf32>
    %cst_59 = arith.constant 1.000000e+00 : f32
    %136 = vector.broadcast %cst_59 : f32 to vector<8x128xf32>
    %137 = arith.addf %136, %135 : vector<8x128xf32>
    %138 = tpu.reciprocal %137 {approx = true} : vector<8x128xf32> -> vector<8x128xf32>
    %cst_60 = arith.constant 1.000000e+00 : f32
    %139 = vector.broadcast %cst_60 : f32 to vector<8x128xf32>
    %140 = arith.subf %139, %138 : vector<8x128xf32>
    %141 = arith.truncf %138 : vector<8x128xf32> to vector<8x128xbf16>
    %cst_61 = arith.constant dense<0.000000e+00> : vector<32x128xf32>
    %142 = tpu.matmul %29, %141, %cst_61 {dimension_numbers = #tpu.dot_dimension_numbers<[1], [0], [0], [1], [0, 0, 1, 1], [], []>} : vector<32x8xbf16>, vector<8x128xbf16>, vector<32x128xf32> -> vector<32x128xf32>
    %143 = vector.extract_strided_slice %24 {offsets = [0, 0], sizes = [32, 128], strides = [1, 1]} : vector<32x256xbf16> to vector<32x128xbf16>
    %144 = arith.extf %143 : vector<32x128xbf16> to vector<32x128xf32>
    %145 = arith.mulf %142, %144 : vector<32x128xf32>
    %146 = arith.truncf %140 : vector<8x128xf32> to vector<8x128xbf16>
    %cst_62 = arith.constant dense<0.000000e+00> : vector<32x128xf32>
    %147 = tpu.matmul %29, %146, %cst_62 {dimension_numbers = #tpu.dot_dimension_numbers<[1], [0], [0], [1], [0, 0, 1, 1], [], []>} : vector<32x8xbf16>, vector<8x128xbf16>, vector<32x128xf32> -> vector<32x128xf32>
    %148 = vector.extract_strided_slice %24 {offsets = [0, 128], sizes = [32, 128], strides = [1, 1]} : vector<32x256xbf16> to vector<32x128xbf16>
    %149 = arith.extf %148 : vector<32x128xbf16> to vector<32x128xf32>
    %150 = arith.mulf %147, %149 : vector<32x128xf32>
    %151 = arith.addf %145, %150 : vector<32x128xf32>
    %152 = tpu.concatenate %126, %151 in 0 : vector<32x128xf32>, vector<32x128xf32> -> vector<64x128xf32>
    %153 = arith.truncf %152 : vector<64x128xf32> to vector<64x128xbf16>
    %cst_63 = arith.constant dense<0.000000e+00> : vector<32x128xf32>
    %154 = tpu.matmul %30, %153, %cst_63 {dimension_numbers = #tpu.dot_dimension_numbers<[1], [0], [0], [1], [0, 0, 1, 1], [], []>} : vector<32x64xbf16>, vector<64x128xbf16>, vector<32x128xf32> -> vector<32x128xf32>
    %155 = vector.broadcast %31 : vector<32x1xf32> to vector<32x128xf32>
    %156 = arith.addf %154, %155 : vector<32x128xf32>
    %157 = arith.truncf %156 : vector<32x128xf32> to vector<32x128xbf16>
    %c1_64 = arith.constant 1 : index
    %c0_65 = arith.constant 0 : index
    %c0_66 = arith.constant 0 : index
    %158 = vector.load %arg11[%c1_64, %c0_65, %c0_66] : memref<2x32x128xbf16, #tpu.memory_space<vmem>>, vector<1x32x128xbf16>
    %159 = vector.shape_cast %158 : vector<1x32x128xbf16> to vector<32x128xbf16>
    %160 = vector.shape_cast %157 : vector<32x128xbf16> to vector<1x32x128xbf16>
    tpu.vector_store %arg11[%c1_64, %c0_65, %c0_66], %160 {strides = array<i32>} : memref<2x32x128xbf16, #tpu.memory_space<vmem>>, vector<1x32x128xbf16>,
    %cst_67 = arith.constant dense<0.000000e+00> : vector<128xf32>
    %161 = vector.multi_reduction <add>, %156, %cst_67 [0] : vector<32x128xf32> to vector<128xf32>
    %162 = vector.shape_cast %161 : vector<128xf32> to vector<1x128xf32>
    %c0_68 = arith.constant 0 : index
    %c2 = arith.constant 2 : index
    %c0_69 = arith.constant 0 : index
    %163 = vector.load %arg12[%c0_68, %c2, %c0_69] : memref<1x4x128xf32, #tpu.memory_space<vmem>>, vector<1x1x128xf32>
    %164 = vector.shape_cast %163 : vector<1x1x128xf32> to vector<1x128xf32>
    %165 = vector.shape_cast %162 : vector<1x128xf32> to vector<1x1x128xf32>
    tpu.vector_store %arg12[%c0_68, %c2, %c0_69], %165 {strides = array<i32>} : memref<1x4x128xf32, #tpu.memory_space<vmem>>, vector<1x1x128xf32>,
    %166 = arith.mulf %156, %156 : vector<32x128xf32>
    %cst_70 = arith.constant dense<0.000000e+00> : vector<128xf32>
    %167 = vector.multi_reduction <add>, %166, %cst_70 [0] : vector<32x128xf32> to vector<128xf32>
    %168 = vector.shape_cast %167 : vector<128xf32> to vector<1x128xf32>
    %c0_71 = arith.constant 0 : index
    %c3 = arith.constant 3 : index
    %c0_72 = arith.constant 0 : index
    %169 = vector.load %arg12[%c0_71, %c3, %c0_72] : memref<1x4x128xf32, #tpu.memory_space<vmem>>, vector<1x1x128xf32>
    %170 = vector.shape_cast %169 : vector<1x1x128xf32> to vector<1x128xf32>
    %171 = vector.shape_cast %168 : vector<1x128xf32> to vector<1x1x128xf32>
    tpu.vector_store %arg12[%c0_71, %c3, %c0_72], %171 {strides = array<i32>} : memref<1x4x128xf32, #tpu.memory_space<vmem>>, vector<1x1x128xf32>,
    return
  }
  func.func @transform_0(%arg0: i32) -> (i32, i32, i32) {
    %c0_i32 = arith.constant 0 : i32
    %c0_i32_0 = arith.constant 0 : i32
    %c0_i32_1 = arith.constant 0 : i32
    return %c0_i32, %c0_i32_0, %arg0 : i32, i32, i32
  }
  func.func @transform_1(%arg0: i32) -> (i32, i32, i32) {
    %c0_i32 = arith.constant 0 : i32
    %c0_i32_0 = arith.constant 0 : i32
    %c0_i32_1 = arith.constant 0 : i32
    return %c0_i32, %c0_i32_0, %arg0 : i32, i32, i32
  }
  func.func @transform_2(%arg0: i32) -> (i32, i32) {
    %c0_i32 = arith.constant 0 : i32
    %c0_i32_0 = arith.constant 0 : i32
    %c0_i32_1 = arith.constant 0 : i32
    return %c0_i32, %c0_i32_0 : i32, i32
  }
  func.func @transform_3(%arg0: i32) -> (i32, i32) {
    %c0_i32 = arith.constant 0 : i32
    %c0_i32_0 = arith.constant 0 : i32
    %c0_i32_1 = arith.constant 0 : i32
    return %c0_i32, %c0_i32_0 : i32, i32
  }
  func.func @transform_4(%arg0: i32) -> (i32, i32) {
    %c0_i32 = arith.constant 0 : i32
    %c0_i32_0 = arith.constant 0 : i32
    %c0_i32_1 = arith.constant 0 : i32
    return %c0_i32, %c0_i32_0 : i32, i32
  }
  func.func @transform_5(%arg0: i32) -> (i32, i32) {
    %c0_i32 = arith.constant 0 : i32
    %c0_i32_0 = arith.constant 0 : i32
    %c0_i32_1 = arith.constant 0 : i32
    return %c0_i32, %c0_i32_0 : i32, i32
  }
  func.func @transform_6(%arg0: i32) -> (i32, i32) {
    %c0_i32 = arith.constant 0 : i32
    %c0_i32_0 = arith.constant 0 : i32
    %c0_i32_1 = arith.constant 0 : i32
    return %c0_i32, %c0_i32_0 : i32, i32
  }
  func.func @transform_7(%arg0: i32) -> (i32, i32) {
    %c0_i32 = arith.constant 0 : i32
    %c0_i32_0 = arith.constant 0 : i32
    %c0_i32_1 = arith.constant 0 : i32
    return %c0_i32, %c0_i32_0 : i32, i32
  }
  func.func @transform_8(%arg0: i32) -> (i32, i32) {
    %c0_i32 = arith.constant 0 : i32
    %c0_i32_0 = arith.constant 0 : i32
    %c0_i32_1 = arith.constant 0 : i32
    return %c0_i32, %c0_i32_0 : i32, i32
  }
  func.func @transform_9(%arg0: i32) -> (i32, i32) {
    %c0_i32 = arith.constant 0 : i32
    %c0_i32_0 = arith.constant 0 : i32
    %c0_i32_1 = arith.constant 0 : i32
    return %c0_i32, %c0_i32_0 : i32, i32
  }
  func.func @transform_10(%arg0: i32) -> (i32, i32, i32) {
    %c0_i32 = arith.constant 0 : i32
    %c0_i32_0 = arith.constant 0 : i32
    %c0_i32_1 = arith.constant 0 : i32
    return %c0_i32, %c0_i32_0, %arg0 : i32, i32, i32
  }
  func.func @transform_11(%arg0: i32) -> (i32, i32, i32) {
    %c0_i32 = arith.constant 0 : i32
    %c0_i32_0 = arith.constant 0 : i32
    %c0_i32_1 = arith.constant 0 : i32
    return %arg0, %c0_i32, %c0_i32_0 : i32, i32, i32
  }
}

</mosaic_0001>

<llo_original>
// kernel: tpu_custom_call.1
$region0: #{tpu_custom_call.1}
  #allocation0 [shape = 'u32[]', space=smem, size = 0x4, offset = 0x4, fixed_abs, tag = 'smem constant byte address 0x4 - core index']
  #allocation1 [shape = 'u32[144,128]{1,0:T(1,128)}', space=vmem, size = 0x12000, scoped, tag = 'internal scratch']
  %s0 = inlined_call_operand.vmem [shape: bf16[2,4,256], index: 0, kind: input, shape index: {}]
  %s1 = inlined_call_operand.vmem [shape: bf16[2,6,256], index: 1, kind: input, shape index: {}]
  %s2 = inlined_call_operand.vmem [shape: bf16[96,4], index: 2, kind: input, shape index: {}]
  %s3 = inlined_call_operand.vmem [shape: f32[96,1], index: 3, kind: input, shape index: {}]
  %s4 = inlined_call_operand.vmem [shape: bf16[96,6], index: 4, kind: input, shape index: {}]
  %s5 = inlined_call_operand.vmem [shape: f32[96,1], index: 5, kind: input, shape index: {}]
  %s6 = inlined_call_operand.vmem [shape: bf16[32,64], index: 6, kind: input, shape index: {}]
  %s7 = inlined_call_operand.vmem [shape: f32[32,1], index: 7, kind: input, shape index: {}]
  %s8 = inlined_call_operand.vmem [shape: bf16[8,32], index: 8, kind: input, shape index: {}]
  %s9 = inlined_call_operand.vmem [shape: bf16[32,8], index: 9, kind: input, shape index: {}]
  %s10 = inlined_call_operand.hbm [shape: bf16[2,32,256], index: 10, kind: output, shape index: {0}]
  %s11 = inlined_call_operand.hbm [shape: f32[2,4,128], index: 11, kind: output, shape index: {1}]
  %12 = xla_tuple %s10, %s11
  %s13 = sld [smem:[#allocation0]]
  $region156: #{tpu_custom_call.1} parent=0
    _
  %s15 = ssub.s32 1, %s13
  %s16 = scalar_select 0, %s15, %s13
  $region1: #{tpu_custom_call.1} parent=0
    #allocation2 [shape = 'u8[4096]{0}', space=vmem, size = 0x1000, scoped, tag = 'input window, operand 0']
    #allocation3 [shape = 'u8[8192]{0}', space=vmem, size = 0x2000, scoped, tag = 'input window, operand 1']
    #allocation4 [shape = 'u8[32768]{0}', space=vmem, size = 0x8000, scoped, tag = 'output window, operand 0']
    #allocation5 [shape = 's32[2]{0}', space=sflag, size = 0x8, scoped, tag = 'scoped memory for tpu_custom_call.1']
    #allocation6 [shape = 'u8[4096]{0}', space=vmem, size = 0x1000, scoped, tag = 'output window, operand 1']
    #allocation7 [shape = 's32[2]{0}', space=sflag, size = 0x8, scoped, tag = 'scoped memory for tpu_custom_call.1']
    %17 = vsyncpa [#allocation5], 0
    %s18 = scalar_lea.sflag [#allocation5], 1
    %19 = vsyncpa %s18, 0
    %20 = vsyncpa [#allocation7], 0
    %s21 = scalar_lea.sflag [#allocation7], 1
    %22 = vsyncpa %s21, 0
    loop: start=0, step=1, limit=4
    $region2: #{tpu_custom_call.1} parent=1 // loop_pre_header
      _
    $region3: #{tpu_custom_call.1} parent=1 // loop_header
      %s24 = sphi 0, %s28
      %p25 = scmp.ge.s32.totalorder %s24, 4
      %s34 = sphi 0, %s36
      %s37 = sphi 0, %s34
      %s38 = sphi 0, %s37
      %s54 = sphi 0, %s38
      %s60 = sphi 0, %s62
      %s63 = sphi 0, %s60
      %s64 = sphi 0, %s63
      %s80 = sphi 0, %s64
      %s84 = sphi 0, %s84
      %s86 = sphi 0, %s84
      %s87 = sphi 0, %s86
      %s101 = sphi 0, %s87
      %s105 = sphi 0, %s105
      %s107 = sphi 0, %s105
      %s108 = sphi 0, %s107
      %s122 = sphi 0, %s108
      %s126 = sphi 0, %s126
      %s128 = sphi 0, %s126
      %s129 = sphi 0, %s128
      %s143 = sphi 0, %s129
      %s147 = sphi 0, %s147
      %s149 = sphi 0, %s147
      %s150 = sphi 0, %s149
      %s164 = sphi 0, %s150
      %s168 = sphi 0, %s168
      %s170 = sphi 0, %s168
      %s171 = sphi 0, %s170
      %s185 = sphi 0, %s171
      %s189 = sphi 0, %s189
      %s191 = sphi 0, %s189
      %s192 = sphi 0, %s191
      %s206 = sphi 0, %s192
      %s210 = sphi 0, %s210
      %s212 = sphi 0, %s210
      %s213 = sphi 0, %s212
      %s227 = sphi 0, %s213
      %s231 = sphi 0, %s231
      %s233 = sphi 0, %s231
      %s234 = sphi 0, %s233
      %s248 = sphi 0, %s234
      %s254 = sphi 0, %s256
      %s257 = sphi 0, %s254
      %s258 = sphi 0, %s257
      %s274 = sphi 0, %s258
      %s280 = sphi 0, %s282
      %s283 = sphi 0, %s280
      %s284 = sphi 0, %s283
      %s300 = sphi 0, %s284
    $region4: #{tpu_custom_call.1} parent=1 // loop_header_branch
      %27 = sbr.rel (%p25) target = $region8
    $region5: #{tpu_custom_call.1} parent=1 // loop_body
      %s29 = ssub.s32 %s24, 1
      %s30 = ssub.s32 %s24, 2
      %s31 = sadd.s32 %s24, 1
      %s32 = ssub.s32 %s24, %s31
      %p33 = scmp.eq.s32.totalorder %s32, 0
      %s35 = sadd.s32 %s34, 1
      %s36 = scalar_select %p33, %s34, %s35
      %p39 = pneg %p33
      %p40 = scmp.eq.s32.totalorder %s24, 1
      %p41 = por %p39, %p40
      %p42 = scmp.ne.s32.totalorder %s34, %s37
      %p43 = scmp.eq.s32.totalorder %s24, 0
      %p44 = por %p42, %p43
      %p45 = scmp.ne.s32.totalorder %s34, %s37
      %p46 = scmp.eq.s32.totalorder %s29, 1
      %p47 = por %p45, %p46
      %p48 = scmp.ne.s32.totalorder %s37, %s38
      %p49 = scmp.eq.s32.totalorder %s29, 0
      %p50 = por %p48, %p49
      %p51 = scmp.ne.s32.totalorder %s37, %s38
      %p52 = scmp.eq.s32.totalorder %s30, 1
      %p53 = por %p51, %p52
      %p55 = scmp.ne.s32.totalorder %s38, %s54
      %p56 = scmp.eq.s32.totalorder %s30, 0
      %p57 = por %p55, %p56
      %s58 = ssub.s32 %s24, %s31
      %p59 = scmp.eq.s32.totalorder %s58, 0
      %s61 = sadd.s32 %s60, 1
      %s62 = scalar_select %p59, %s60, %s61
      %p65 = pneg %p59
      %p66 = scmp.eq.s32.totalorder %s24, 1
      %p67 = por %p65, %p66
      %p68 = scmp.ne.s32.totalorder %s60, %s63
      %p69 = scmp.eq.s32.totalorder %s24, 0
      %p70 = por %p68, %p69
      %p71 = scmp.ne.s32.totalorder %s60, %s63
      %p72 = scmp.eq.s32.totalorder %s29, 1
      %p73 = por %p71, %p72
      %p74 = scmp.ne.s32.totalorder %s63, %s64
      %p75 = scmp.eq.s32.totalorder %s29, 0
      %p76 = por %p74, %p75
      %p77 = scmp.ne.s32.totalorder %s63, %s64
      %p78 = scmp.eq.s32.totalorder %s30, 1
      %p79 = por %p77, %p78
      %p81 = scmp.ne.s32.totalorder %s64, %s80
      %p82 = scmp.eq.s32.totalorder %s30, 0
      %p83 = por %p81, %p82
      %s85 = sadd.s32 %s84, 1
      %p88 = scmp.eq.s32.totalorder %s24, 1
      %p89 = scmp.ne.s32.totalorder %s84, %s86
      %p90 = scmp.eq.s32.totalorder %s24, 0
      %p91 = por %p89, %p90
      %p92 = scmp.ne.s32.totalorder %s84, %s86
      %p93 = scmp.eq.s32.totalorder %s29, 1
      %p94 = por %p92, %p93
      %p95 = scmp.ne.s32.totalorder %s86, %s87
      %p96 = scmp.eq.s32.totalorder %s29, 0
      %p97 = por %p95, %p96
      %p98 = scmp.ne.s32.totalorder %s86, %s87
      %p99 = scmp.eq.s32.totalorder %s30, 1
      %p100 = por %p98, %p99
      %p102 = scmp.ne.s32.totalorder %s87, %s101
      %p103 = scmp.eq.s32.totalorder %s30, 0
      %p104 = por %p102, %p103
      %s106 = sadd.s32 %s105, 1
      %p109 = scmp.eq.s32.totalorder %s24, 1
      %p110 = scmp.ne.s32.totalorder %s105, %s107
      %p111 = scmp.eq.s32.totalorder %s24, 0
      %p112 = por %p110, %p111
      %p113 = scmp.ne.s32.totalorder %s105, %s107
      %p114 = scmp.eq.s32.totalorder %s29, 1
      %p115 = por %p113, %p114
      %p116 = scmp.ne.s32.totalorder %s107, %s108
      %p117 = scmp.eq.s32.totalorder %s29, 0
      %p118 = por %p116, %p117
      %p119 = scmp.ne.s32.totalorder %s107, %s108
      %p120 = scmp.eq.s32.totalorder %s30, 1
      %p121 = por %p119, %p120
      %p123 = scmp.ne.s32.totalorder %s108, %s122
      %p124 = scmp.eq.s32.totalorder %s30, 0
      %p125 = por %p123, %p124
      %s127 = sadd.s32 %s126, 1
      %p130 = scmp.eq.s32.totalorder %s24, 1
      %p131 = scmp.ne.s32.totalorder %s126, %s128
      %p132 = scmp.eq.s32.totalorder %s24, 0
      %p133 = por %p131, %p132
      %p134 = scmp.ne.s32.totalorder %s126, %s128
      %p135 = scmp.eq.s32.totalorder %s29, 1
      %p136 = por %p134, %p135
      %p137 = scmp.ne.s32.totalorder %s128, %s129
      %p138 = scmp.eq.s32.totalorder %s29, 0
      %p139 = por %p137, %p138
      %p140 = scmp.ne.s32.totalorder %s128, %s129
      %p141 = scmp.eq.s32.totalorder %s30, 1
      %p142 = por %p140, %p141
      %p144 = scmp.ne.s32.totalorder %s129, %s143
      %p145 = scmp.eq.s32.totalorder %s30, 0
      %p146 = por %p144, %p145
      %s148 = sadd.s32 %s147, 1
      %p151 = scmp.eq.s32.totalorder %s24, 1
      %p152 = scmp.ne.s32.totalorder %s147, %s149
      %p153 = scmp.eq.s32.totalorder %s24, 0
      %p154 = por %p152, %p153
      %p155 = scmp.ne.s32.totalorder %s147, %s149
      %p156 = scmp.eq.s32.totalorder %s29, 1
      %p157 = por %p155, %p156
      %p158 = scmp.ne.s32.totalorder %s149, %s150
      %p159 = scmp.eq.s32.totalorder %s29, 0
      %p160 = por %p158, %p159
      %p161 = scmp.ne.s32.totalorder %s149, %s150
      %p162 = scmp.eq.s32.totalorder %s30, 1
      %p163 = por %p161, %p162
      %p165 = scmp.ne.s32.totalorder %s150, %s164
      %p166 = scmp.eq.s32.totalorder %s30, 0
      %p167 = por %p165, %p166
      %s169 = sadd.s32 %s168, 1
      %p172 = scmp.eq.s32.totalorder %s24, 1
      %p173 = scmp.ne.s32.totalorder %s168, %s170
      %p174 = scmp.eq.s32.totalorder %s24, 0
      %p175 = por %p173, %p174
      %p176 = scmp.ne.s32.totalorder %s168, %s170
      %p177 = scmp.eq.s32.totalorder %s29, 1
      %p178 = por %p176, %p177
      %p179 = scmp.ne.s32.totalorder %s170, %s171
      %p180 = scmp.eq.s32.totalorder %s29, 0
      %p181 = por %p179, %p180
      %p182 = scmp.ne.s32.totalorder %s170, %s171
      %p183 = scmp.eq.s32.totalorder %s30, 1
      %p184 = por %p182, %p183
      %p186 = scmp.ne.s32.totalorder %s171, %s185
      %p187 = scmp.eq.s32.totalorder %s30, 0
      %p188 = por %p186, %p187
      %s190 = sadd.s32 %s189, 1
      %p193 = scmp.eq.s32.totalorder %s24, 1
      %p194 = scmp.ne.s32.totalorder %s189, %s191
      %p195 = scmp.eq.s32.totalorder %s24, 0
      %p196 = por %p194, %p195
      %p197 = scmp.ne.s32.totalorder %s189, %s191
      %p198 = scmp.eq.s32.totalorder %s29, 1
      %p199 = por %p197, %p198
      %p200 = scmp.ne.s32.totalorder %s191, %s192
      %p201 = scmp.eq.s32.totalorder %s29, 0
      %p202 = por %p200, %p201
      %p203 = scmp.ne.s32.totalorder %s191, %s192
      %p204 = scmp.eq.s32.totalorder %s30, 1
      %p205 = por %p203, %p204
      %p207 = scmp.ne.s32.totalorder %s192, %s206
      %p208 = scmp.eq.s32.totalorder %s30, 0
      %p209 = por %p207, %p208
      %s211 = sadd.s32 %s210, 1
      %p214 = scmp.eq.s32.totalorder %s24, 1
      %p215 = scmp.ne.s32.totalorder %s210, %s212
      %p216 = scmp.eq.s32.totalorder %s24, 0
      %p217 = por %p215, %p216
      %p218 = scmp.ne.s32.totalorder %s210, %s212
      %p219 = scmp.eq.s32.totalorder %s29, 1
      %p220 = por %p218, %p219
      %p221 = scmp.ne.s32.totalorder %s212, %s213
      %p222 = scmp.eq.s32.totalorder %s29, 0
      %p223 = por %p221, %p222
      %p224 = scmp.ne.s32.totalorder %s212, %s213
      %p225 = scmp.eq.s32.totalorder %s30, 1
      %p226 = por %p224, %p225
      %p228 = scmp.ne.s32.totalorder %s213, %s227
      %p229 = scmp.eq.s32.totalorder %s30, 0
      %p230 = por %p228, %p229
      %s232 = sadd.s32 %s231, 1
      %p235 = scmp.eq.s32.totalorder %s24, 1
      %p236 = scmp.ne.s32.totalorder %s231, %s233
      %p237 = scmp.eq.s32.totalorder %s24, 0
      %p238 = por %p236, %p237
      %p239 = scmp.ne.s32.totalorder %s231, %s233
      %p240 = scmp.eq.s32.totalorder %s29, 1
      %p241 = por %p239, %p240
      %p242 = scmp.ne.s32.totalorder %s233, %s234
      %p243 = scmp.eq.s32.totalorder %s29, 0
      %p244 = por %p242, %p243
      %p245 = scmp.ne.s32.totalorder %s233, %s234
      %p246 = scmp.eq.s32.totalorder %s30, 1
      %p247 = por %p245, %p246
      %p249 = scmp.ne.s32.totalorder %s234, %s248
      %p250 = scmp.eq.s32.totalorder %s30, 0
      %p251 = por %p249, %p250
      %s252 = ssub.s32 %s24, %s31
      %p253 = scmp.eq.s32.totalorder %s252, 0
      %s255 = sadd.s32 %s254, 1
      %s256 = scalar_select %p253, %s254, %s255
      %p259 = pneg %p253
      %p260 = scmp.eq.s32.totalorder %s24, 1
      %p261 = por %p259, %p260
      %p262 = scmp.ne.s32.totalorder %s254, %s257
      %p263 = scmp.eq.s32.totalorder %s24, 0
      %p264 = por %p262, %p263
      %p265 = scmp.ne.s32.totalorder %s254, %s257
      %p266 = scmp.eq.s32.totalorder %s29, 1
      %p267 = por %p265, %p266
      %p268 = scmp.ne.s32.totalorder %s257, %s258
      %p269 = scmp.eq.s32.totalorder %s29, 0
      %p270 = por %p268, %p269
      %p271 = scmp.ne.s32.totalorder %s257, %s258
      %p272 = scmp.eq.s32.totalorder %s30, 1
      %p273 = por %p271, %p272
      %p275 = scmp.ne.s32.totalorder %s258, %s274
      %p276 = scmp.eq.s32.totalorder %s30, 0
      %p277 = por %p275, %p276
      %s278 = ssub.s32 %s24, %s31
      %p279 = scmp.eq.s32.totalorder %s278, 0
      %s281 = sadd.s32 %s280, 1
      %s282 = scalar_select %p279, %s280, %s281
      %p285 = pneg %p279
      %p286 = scmp.eq.s32.totalorder %s24, 1
      %p287 = por %p285, %p286
      %p288 = scmp.ne.s32.totalorder %s280, %s283
      %p289 = scmp.eq.s32.totalorder %s24, 0
      %p290 = por %p288, %p289
      %p291 = scmp.ne.s32.totalorder %s280, %s283
      %p292 = scmp.eq.s32.totalorder %s29, 1
      %p293 = por %p291, %p292
      %p294 = scmp.ne.s32.totalorder %s283, %s284
      %p295 = scmp.eq.s32.totalorder %s29, 0
      %p296 = por %p294, %p295
      %p297 = scmp.ne.s32.totalorder %s283, %s284
      %p298 = scmp.eq.s32.totalorder %s30, 1
      %p299 = por %p297, %p298
      %p301 = scmp.ne.s32.totalorder %s284, %s300
      %p302 = scmp.eq.s32.totalorder %s30, 0
      %p303 = por %p301, %p302
      %p304 = scmp.le.s32.totalorder 1, %s24
      %p305 = scmp.lt.s32.totalorder %s24, 3
      %p306 = pnand %p304, %p305
      %p307 = pneg %p306
      // Predicated region
      $region9: #{tpu_custom_call.1} parent=5 // pred_check
        _
      $region10: #{tpu_custom_call.1} parent=5 // pred_check_branch
        %309 = sbr.rel (%p306) target = $region12
      $region11: #{tpu_custom_call.1} parent=5 // pred_region
        %s310 = ssub.s32 %s24, 1
        // Predicated region
        $region13: #{tpu_custom_call.1} parent=11 // pred_check
          %p311 = pneg %p97
        $region14: #{tpu_custom_call.1} parent=11 // pred_check_branch
          %313 = sbr.rel (%p311) target = $region16
        $region15: #{tpu_custom_call.1} parent=11 // pred_region
          _
        $region16: #{tpu_custom_call.1} parent=11 // pred_fallthru
          _
        // Predicated region
        $region17: #{tpu_custom_call.1} parent=11 // pred_check
          %p314 = pneg %p118
        $region18: #{tpu_custom_call.1} parent=11 // pred_check_branch
          %316 = sbr.rel (%p314) target = $region20
        $region19: #{tpu_custom_call.1} parent=11 // pred_region
          _
        $region20: #{tpu_custom_call.1} parent=11 // pred_fallthru
          _
        // Predicated region
        $region21: #{tpu_custom_call.1} parent=11 // pred_check
          %p317 = pneg %p139
        $region22: #{tpu_custom_call.1} parent=11 // pred_check_branch
          %319 = sbr.rel (%p317) target = $region24
        $region23: #{tpu_custom_call.1} parent=11 // pred_region
          _
        $region24: #{tpu_custom_call.1} parent=11 // pred_fallthru
          _
        // Predicated region
        $region25: #{tpu_custom_call.1} parent=11 // pred_check
          %p320 = pneg %p160
        $region26: #{tpu_custom_call.1} parent=11 // pred_check_branch
          %322 = sbr.rel (%p320) target = $region28
        $region27: #{tpu_custom_call.1} parent=11 // pred_region
          _
        $region28: #{tpu_custom_call.1} parent=11 // pred_fallthru
          _
        // Predicated region
        $region29: #{tpu_custom_call.1} parent=11 // pred_check
          %p323 = pneg %p181
        $region30: #{tpu_custom_call.1} parent=11 // pred_check_branch
          %325 = sbr.rel (%p323) target = $region32
        $region31: #{tpu_custom_call.1} parent=11 // pred_region
          _
        $region32: #{tpu_custom_call.1} parent=11 // pred_fallthru
          _
        // Predicated region
        $region33: #{tpu_custom_call.1} parent=11 // pred_check
          %p326 = pneg %p202
        $region34: #{tpu_custom_call.1} parent=11 // pred_check_branch
          %328 = sbr.rel (%p326) target = $region36
        $region35: #{tpu_custom_call.1} parent=11 // pred_region
          _
        $region36: #{tpu_custom_call.1} parent=11 // pred_fallthru
          _
        // Predicated region
        $region37: #{tpu_custom_call.1} parent=11 // pred_check
          %p329 = pneg %p223
        $region38: #{tpu_custom_call.1} parent=11 // pred_check_branch
          %331 = sbr.rel (%p329) target = $region40
        $region39: #{tpu_custom_call.1} parent=11 // pred_region
          _
        $region40: #{tpu_custom_call.1} parent=11 // pred_fallthru
          _
        // Predicated region
        $region41: #{tpu_custom_call.1} parent=11 // pred_check
          %p332 = pneg %p244
        $region42: #{tpu_custom_call.1} parent=11 // pred_check_branch
          %334 = sbr.rel (%p332) target = $region44
        $region43: #{tpu_custom_call.1} parent=11 // pred_region
          _
        $region44: #{tpu_custom_call.1} parent=11 // pred_fallthru
          _
      $region12: #{tpu_custom_call.1} parent=5 // pred_fallthru
        _
      %p335 = scmp.lt.s32.totalorder %s24, 2
      // Predicated region
      $region45: #{tpu_custom_call.1} parent=5 // pred_check
        %p336 = pneg %p335
      $region46: #{tpu_custom_call.1} parent=5 // pred_check_branch
        %338 = sbr.rel (%p336) target = $region48
      $region47: #{tpu_custom_call.1} parent=5 // pred_region
        // Predicated region
        $region49: #{tpu_custom_call.1} parent=47 // pred_check
          %p339 = pneg %p44
        $region50: #{tpu_custom_call.1} parent=47 // pred_check_branch
          %341 = sbr.rel (%p339) target = $region52
        $region51: #{tpu_custom_call.1} parent=47 // pred_region
          %s342 = sand.u32 %s34, 1
          %s343 = sand.u32 %s34, 1
          %s344 = smul.addr %s343, 4
          %s345 = scalar_lea.vmem [#allocation2], %s344
          %s346 = smul.addr %s24, 2
          %s347 = scalar_lea.vmem %s0, %s346
          // Predicated region
          $region53: #{tpu_custom_call.1} parent=51 // pred_check
            _
          $region54: #{tpu_custom_call.1} parent=51 // pred_check_branch
            %349 = sbr.rel (0) target = $region56
          $region55: #{tpu_custom_call.1} parent=51 // pred_region
            // Predicated region
            $region57: #{tpu_custom_call.1} parent=55 // pred_check
              _
            $region58: #{tpu_custom_call.1} parent=55 // pred_check_branch
              %351 = sbr.rel target = $region60
            $region59: #{tpu_custom_call.1} parent=55 // pred_region
              // Predicated region
              $region72: #{tpu_custom_call.1} parent=59 // pred_check
                _
              $region73: #{tpu_custom_call.1} parent=59 // pred_check_branch
                %368 = sbr.rel (0) target = $region75
              $region74: #{tpu_custom_call.1} parent=59 // pred_region
                loop: start=0, step=1, limit=1
                $region76: #{tpu_custom_call.1} parent=74 // loop_pre_header
                  _
                $region77: #{tpu_custom_call.1} parent=74 // loop_header
                  %s371 = sphi 0, %s375
                  %p372 = scmp.ge.s32.totalorder %s371, 1
                  %s376 = sphi %s347, %s347
                  %s377 = sphi %s345, %s345
                $region78: #{tpu_custom_call.1} parent=74 // loop_header_branch
                  %374 = sbr.rel (%p372) target = $region82
                $region79: #{tpu_custom_call.1} parent=74 // loop_body
                  %v378 = vld [vmem:[%s376] sm:$0x3]
                  %379 = vst [vmem:[%s377] sm:$0x3] %v378
                  %v380 = vld [vmem:[%s376 + $0x4] sm:$0x3]
                  %381 = vst [vmem:[%s377 + $0x2] sm:$0x3] %v380
                $region80: #{tpu_custom_call.1} parent=74 // loop_footer
                  %s375 = sadd.s32 1, %s371
                $region81: #{tpu_custom_call.1} parent=74 // loop_footer_branch
                  %370 = sbr.rel target = $region77
                $region82: #{tpu_custom_call.1} parent=74 // loop_exit
                  _
              $region75: #{tpu_custom_call.1} parent=59 // pred_fallthru
                _
            $region60: #{tpu_custom_call.1} parent=55 // pred_fallthru
              _
            // Predicated region
            $region61: #{tpu_custom_call.1} parent=55 // pred_check
              _
            $region62: #{tpu_custom_call.1} parent=55 // pred_check_branch
              %353 = sbr.rel (0) target = $region64
            $region63: #{tpu_custom_call.1} parent=55 // pred_region
              loop: start=0, step=1, limit=1
              $region65: #{tpu_custom_call.1} parent=63 // loop_pre_header
                _
              $region66: #{tpu_custom_call.1} parent=63 // loop_header
                %s356 = sphi 0, %s360
                %p357 = scmp.ge.s32.totalorder %s356, 1
                %s361 = sphi %s347, %s347
                %s362 = sphi %s345, %s345
              $region67: #{tpu_custom_call.1} parent=63 // loop_header_branch
                %359 = sbr.rel (%p357) target = $region71
              $region68: #{tpu_custom_call.1} parent=63 // loop_body
                %v363 = vld [vmem:[%s361] sm:$0x3]
                %364 = vst [vmem:[%s362] sm:$0x3] %v363
                %v365 = vld [vmem:[%s361 + $0x4] sm:$0x3]
                %366 = vst [vmem:[%s362 + $0x2] sm:$0x3] %v365
              $region69: #{tpu_custom_call.1} parent=63 // loop_footer
                %s360 = sadd.s32 1, %s356
              $region70: #{tpu_custom_call.1} parent=63 // loop_footer_branch
                %355 = sbr.rel target = $region66
              $region71: #{tpu_custom_call.1} parent=63 // loop_exit
                _
            $region64: #{tpu_custom_call.1} parent=55 // pred_fallthru
              _
          $region56: #{tpu_custom_call.1} parent=51 // pred_fallthru
            _
          %382 = vnop
        $region52: #{tpu_custom_call.1} parent=47 // pred_fallthru
          _
        // Predicated region
        $region83: #{tpu_custom_call.1} parent=47 // pred_check
          %p383 = pneg %p70
        $region84: #{tpu_custom_call.1} parent=47 // pred_check_branch
          %385 = sbr.rel (%p383) target = $region86
        $region85: #{tpu_custom_call.1} parent=47 // pred_region
          %s386 = sand.u32 %s60, 1
          %s387 = sand.u32 %s60, 1
          %s388 = smul.addr %s387, 8
          %s389 = scalar_lea.vmem [#allocation3], %s388
          %s390 = smul.addr %s24, 4
          %s391 = scalar_lea.vmem %s1, %s390
          // Predicated region
          $region87: #{tpu_custom_call.1} parent=85 // pred_check
            _
          $region88: #{tpu_custom_call.1} parent=85 // pred_check_branch
            %393 = sbr.rel (0) target = $region90
          $region89: #{tpu_custom_call.1} parent=85 // pred_region
            // Predicated region
            $region91: #{tpu_custom_call.1} parent=89 // pred_check
              _
            $region92: #{tpu_custom_call.1} parent=89 // pred_check_branch
              %395 = sbr.rel target = $region94
            $region93: #{tpu_custom_call.1} parent=89 // pred_region
              // Predicated region
              $region106: #{tpu_custom_call.1} parent=93 // pred_check
                _
              $region107: #{tpu_custom_call.1} parent=93 // pred_check_branch
                %412 = sbr.rel (0) target = $region109
              $region108: #{tpu_custom_call.1} parent=93 // pred_region
                loop: start=0, step=1, limit=1
                $region110: #{tpu_custom_call.1} parent=108 // loop_pre_header
                  _
                $region111: #{tpu_custom_call.1} parent=108 // loop_header
                  %s414 = sphi 0, %s418
                  %p415 = scmp.ge.s32.totalorder %s414, 1
                  %s419 = sphi %s391, %s391
                  %s420 = sphi %s389, %s389
                $region112: #{tpu_custom_call.1} parent=108 // loop_header_branch
                  %417 = sbr.rel (%p415) target = $region116
                $region113: #{tpu_custom_call.1} parent=108 // loop_body
                  _
                $region114: #{tpu_custom_call.1} parent=108 // loop_footer
                  %s418 = sadd.s32 1, %s414
                $region115: #{tpu_custom_call.1} parent=108 // loop_footer_branch
                  %413 = sbr.rel target = $region111
                $region116: #{tpu_custom_call.1} parent=108 // loop_exit
                  _
                loop: start=0, step=1, limit=1
                $region117: #{tpu_custom_call.1} parent=108 // loop_pre_header
                  _
                $region118: #{tpu_custom_call.1} parent=108 // loop_header
                  %s423 = sphi 0, %s427
                  %p424 = scmp.ge.s32.totalorder %s423, 1
                  %s428 = sphi %s391, %s391
                  %s429 = sphi %s389, %s389
                $region119: #{tpu_custom_call.1} parent=108 // loop_header_branch
                  %426 = sbr.rel (%p424) target = $region123
                $region120: #{tpu_custom_call.1} parent=108 // loop_body
                  %v430 = vld [vmem:[%s428] sm:$0xf]
                  %431 = vst [vmem:[%s429] sm:$0xf] %v430
                  %v432 = vld [vmem:[%s428 + $0x8] sm:$0xf]
                  %433 = vst [vmem:[%s429 + $0x4] sm:$0xf] %v432
                $region121: #{tpu_custom_call.1} parent=108 // loop_footer
                  %s427 = sadd.s32 1, %s423
                $region122: #{tpu_custom_call.1} parent=108 // loop_footer_branch
                  %422 = sbr.rel target = $region118
                $region123: #{tpu_custom_call.1} parent=108 // loop_exit
                  _
              $region109: #{tpu_custom_call.1} parent=93 // pred_fallthru
                _
            $region94: #{tpu_custom_call.1} parent=89 // pred_fallthru
              _
            // Predicated region
            $region95: #{tpu_custom_call.1} parent=89 // pred_check
              _
            $region96: #{tpu_custom_call.1} parent=89 // pred_check_branch
              %397 = sbr.rel (0) target = $region98
            $region97: #{tpu_custom_call.1} parent=89 // pred_region
              loop: start=0, step=1, limit=1
              $region99: #{tpu_custom_call.1} parent=97 // loop_pre_header
                _
              $region100: #{tpu_custom_call.1} parent=97 // loop_header
                %s400 = sphi 0, %s404
                %p401 = scmp.ge.s32.totalorder %s400, 1
                %s405 = sphi %s391, %s391
                %s406 = sphi %s389, %s389
              $region101: #{tpu_custom_call.1} parent=97 // loop_header_branch
                %403 = sbr.rel (%p401) target = $region105
              $region102: #{tpu_custom_call.1} parent=97 // loop_body
                %v407 = vld [vmem:[%s405] sm:$0xf]
                %408 = vst [vmem:[%s406] sm:$0xf] %v407
                %v409 = vld [vmem:[%s405 + $0x8] sm:$0xf]
                %410 = vst [vmem:[%s406 + $0x4] sm:$0xf] %v409
              $region103: #{tpu_custom_call.1} parent=97 // loop_footer
                %s404 = sadd.s32 1, %s400
              $region104: #{tpu_custom_call.1} parent=97 // loop_footer_branch
                %399 = sbr.rel target = $region100
              $region105: #{tpu_custom_call.1} parent=97 // loop_exit
                _
            $region98: #{tpu_custom_call.1} parent=89 // pred_fallthru
              _
          $region90: #{tpu_custom_call.1} parent=85 // pred_fallthru
            _
          %434 = vnop
        $region86: #{tpu_custom_call.1} parent=47 // pred_fallthru
          _
      $region48: #{tpu_custom_call.1} parent=5 // pred_fallthru
        _
      %p435 = scmp.le.s32.totalorder 1, %s24
      %p436 = scmp.lt.s32.totalorder %s24, 3
      %p437 = pnand %p435, %p436
      %p438 = pneg %p437
      // Predicated region
      $region124: #{tpu_custom_call.1} parent=5 // pred_check
        _
      $region125: #{tpu_custom_call.1} parent=5 // pred_check_branch
        %440 = sbr.rel (%p437) target = $region127
      $region126: #{tpu_custom_call.1} parent=5 // pred_region
        %s441 = ssub.s32 %s24, 1
        %s442 = sand.u32 %s37, 1
        %s443 = sand.u32 %s37, 1
        %s444 = smul.addr %s443, 4
        %s445 = scalar_lea.vmem [#allocation2], %s444
        // Predicated region
        $region128: #{tpu_custom_call.1} parent=126 // pred_check
          %p446 = pneg %p50
        $region129: #{tpu_custom_call.1} parent=126 // pred_check_branch
          %448 = sbr.rel (%p446) target = $region131
        $region130: #{tpu_custom_call.1} parent=126 // pred_region
          _
        $region131: #{tpu_custom_call.1} parent=126 // pred_fallthru
          _
        %s449 = sand.u32 %s63, 1
        %s450 = sand.u32 %s63, 1
        %s451 = smul.addr %s450, 8
        %s452 = scalar_lea.vmem [#allocation3], %s451
        // Predicated region
        $region132: #{tpu_custom_call.1} parent=126 // pred_check
          %p453 = pneg %p76
        $region133: #{tpu_custom_call.1} parent=126 // pred_check_branch
          %455 = sbr.rel (%p453) target = $region135
        $region134: #{tpu_custom_call.1} parent=126 // pred_region
          _
        $region135: #{tpu_custom_call.1} parent=126 // pred_fallthru
          _
        %s456 = sand.u32 %s37, 1
        %s457 = sand.u32 %s37, 1
        %s458 = smul.addr %s457, 4
        %s459 = scalar_lea.vmem [#allocation2], %s458
        %p460 = pneg %p50
        %p461 = pneg %p47
        %s462 = sand.u32 %s63, 1
        %s463 = sand.u32 %s63, 1
        %s464 = smul.addr %s463, 8
        %s465 = scalar_lea.vmem [#allocation3], %s464
        %p466 = pneg %p76
        %p467 = pneg %p73
        %p468 = pneg %p97
        %p469 = pneg %p94
        %p470 = pneg %p118
        %p471 = pneg %p115
        %p472 = pneg %p139
        %p473 = pneg %p136
        %p474 = pneg %p160
        %p475 = pneg %p157
        %p476 = pneg %p181
        %p477 = pneg %p178
        %p478 = pneg %p202
        %p479 = pneg %p199
        %p480 = pneg %p223
        %p481 = pneg %p220
        %p482 = pneg %p244
        %p483 = pneg %p241
        %p484 = pneg %p270
        %p485 = pneg %p267
        %s486 = sand.u32 %s257, 1
        %s487 = scalar_lea.sflag [#allocation5], %s486
        %s488 = sand.u32 %s257, 1
        %s489 = smul.addr %s488, 32
        %s490 = scalar_lea.vmem [#allocation4], %s489
        %p491 = pneg %p296
        %p492 = pneg %p293
        %s493 = sand.u32 %s283, 1
        %s494 = scalar_lea.sflag [#allocation7], %s493
        %s495 = sand.u32 %s283, 1
        %s496 = smul.addr %s495, 4
        %s497 = scalar_lea.vmem [#allocation6], %s496
        %v499 = vld [vmem:[%s445] sm:$0x3]
        %s500 = scalar_lea.vmem %s445, 2 [#allocation2]
        %v501 = vld [vmem:[%s500] sm:$0x3]
        %v502 = vld [vmem:[%s452] sm:$0x7]
        %s503 = scalar_lea.vmem %s452, 4 [#allocation3]
        %v504 = vld [vmem:[%s503] sm:$0x7]
        %v505 = vld [vmem:[%s2] sm:$0xf]
        %v506 = vld [vmem:[%s2 + $0x4] sm:$0xf]
        %v507 = vld [vmem:[%s2 + $0x8] sm:$0xf]
        %v508 = vld [vmem:[%s2 + $0xc] sm:$0xf]
        %v509 = vld [vmem:[%s2 + $0x10] sm:$0xf]
        %v510 = vld [vmem:[%s2 + $0x14] sm:$0xf]
        %v511 = vld [vmem:[%s2 + $0x18] sm:$0xf]
        %v512 = vld [vmem:[%s2 + $0x1c] sm:$0xf]
        %v513 = vld [vmem:[%s2 + $0x20] sm:$0xf]
        %v514 = vld [vmem:[%s2 + $0x24] sm:$0xf]
        %v515 = vld [vmem:[%s2 + $0x28] sm:$0xf]
        %v516 = vld [vmem:[%s2 + $0x2c] sm:$0xf]
        %v517 = vld [vmem:[%s3] sm:$0xff]
        %v518 = vld [vmem:[%s3 + $0x8] sm:$0xff]
        %v519 = vld [vmem:[%s3 + $0x10] sm:$0xff]
        %v520 = vld [vmem:[%s3 + $0x18] sm:$0xff]
        %v521 = vld [vmem:[%s3 + $0x20] sm:$0xff]
        %v522 = vld [vmem:[%s3 + $0x28] sm:$0xff]
        %v523 = vld [vmem:[%s3 + $0x30] sm:$0xff]
        %v524 = vld [vmem:[%s3 + $0x38] sm:$0xff]
        %v525 = vld [vmem:[%s3 + $0x40] sm:$0xff]
        %v526 = vld [vmem:[%s3 + $0x48] sm:$0xff]
        %v527 = vld [vmem:[%s3 + $0x50] sm:$0xff]
        %v528 = vld [vmem:[%s3 + $0x58] sm:$0xff]
        %530 = vset.pattern.permute.xlu0 0
        %531 = vperm.xlu0 %530, %v517
        %v532 = vpop.permute.xlu0 %531
        %535 = vset.pattern.permute.xlu0 0
        %536 = vperm.xlu0 %535, %v518
        %v537 = vpop.permute.xlu0 %536
        %540 = vset.pattern.permute.xlu0 0
        %541 = vperm.xlu0 %540, %v519
        %v542 = vpop.permute.xlu0 %541
        %545 = vset.pattern.permute.xlu0 0
        %546 = vperm.xlu0 %545, %v520
        %v547 = vpop.permute.xlu0 %546
        %550 = vset.pattern.permute.xlu0 0
        %551 = vperm.xlu0 %550, %v521
        %v552 = vpop.permute.xlu0 %551
        %555 = vset.pattern.permute.xlu0 0
        %556 = vperm.xlu0 %555, %v522
        %v557 = vpop.permute.xlu0 %556
        %560 = vset.pattern.permute.xlu0 0
        %561 = vperm.xlu0 %560, %v523
        %v562 = vpop.permute.xlu0 %561
        %565 = vset.pattern.permute.xlu0 0
        %566 = vperm.xlu0 %565, %v524
        %v567 = vpop.permute.xlu0 %566
        %570 = vset.pattern.permute.xlu0 0
        %571 = vperm.xlu0 %570, %v525
        %v572 = vpop.permute.xlu0 %571
        %575 = vset.pattern.permute.xlu0 0
        %576 = vperm.xlu0 %575, %v526
        %v577 = vpop.permute.xlu0 %576
        %580 = vset.pattern.permute.xlu0 0
        %581 = vperm.xlu0 %580, %v527
        %v582 = vpop.permute.xlu0 %581
        %585 = vset.pattern.permute.xlu0 0
        %586 = vperm.xlu0 %585, %v528
        %v587 = vpop.permute.xlu0 %586
        %v601 = vunpack.c.l.b16 %v505
        %v602 = vunpack.c.l.b16 %v506
        %v603 = vunpack.c.l.b16 %v507
        %v604 = vunpack.c.l.b16 %v508
        %v605 = vunpack.c.l.b16 %v509
        %v606 = vunpack.c.l.b16 %v510
        %v607 = vunpack.c.l.b16 %v511
        %v608 = vunpack.c.l.b16 %v512
        %v609 = vunpack.c.l.b16 %v513
        %v610 = vunpack.c.l.b16 %v514
        %v611 = vunpack.c.l.b16 %v515
        %v612 = vunpack.c.l.b16 %v516
        %v613 = vpack.c.b16 %v602, %v601
        %v614 = vpack.c.b16 %v604, %v603
        %v615 = vpack.c.b16 %v606, %v605
        %v616 = vpack.c.b16 %v608, %v607
        %v617 = vpack.c.b16 %v610, %v609
        %v618 = vpack.c.b16 %v612, %v611
        %vm619 = vcmask 31744
        %v621 = vsel %vm619, %v613, 0
        %v624 = vsel %vm619, %v614, 0
        %v627 = vsel %vm619, %v615, 0
        %v630 = vsel %vm619, %v616, 0
        %v633 = vsel %vm619, %v617, 0
        %v636 = vsel %vm619, %v618, 0
        %vm638 = vcmask 1041408
        %v640 = vsel %vm638, %v499, 0
        %v643 = vsel %vm638, %v501, 0
        %645 = vmatprep.subr.bf16.mxu0 %v643
        %646 = vmatpush1.bf16.msra.mxu0 %v640
        %647 = vmatprep.subr.bf16.mxu0 0
        %648 = vmatpush1.bf16.msra.mxu0 0
        %649 = vmatprep.subr.bf16.mxu0 0
        %650 = vmatpush1.bf16.msra.mxu0 0
        %651 = vmatprep.subr.bf16.mxu0 0
        %652 = vmatpush1.bf16.msra.mxu0 0
        %653 = vmatprep.subr.bf16.mxu0 0
        %654 = vmatpush1.bf16.msra.mxu0 0
        %655 = vmatprep.subr.bf16.mxu0 0
        %656 = vmatpush1.bf16.msra.mxu0 0
        %657 = vmatprep.subr.bf16.mxu0 0
        %658 = vmatpush1.bf16.msra.mxu0 0
        %659 = vmatprep.subr.bf16.mxu0 0
        %660 = vmatpush1.bf16.msra.mxu0 0
        %661 = vmatprep.subr.bf16.mxu0 0
        %662 = vmatpush1.bf16.msra.mxu0 0
        %663 = vmatprep.subr.bf16.mxu0 0
        %664 = vmatpush1.bf16.msra.mxu0 0
        %665 = vmatprep.subr.bf16.mxu0 0
        %666 = vmatpush1.bf16.msra.mxu0 0
        %667 = vmatprep.subr.bf16.mxu0 0
        %668 = vmatpush1.bf16.msra.mxu0 0
        %669 = vmatprep.subr.bf16.mxu0 0
        %670 = vmatpush1.bf16.msra.mxu0 0
        %671 = vmatprep.subr.bf16.mxu0 0
        %672 = vmatpush1.bf16.msra.mxu0 0
        %673 = vmatprep.subr.bf16.mxu0 0
        %674 = vmatpush1.bf16.msra.mxu0 0
        %675 = vmatprep.subr.bf16.mxu0 0
        %676 = vmatpush1.bf16.msra.mxu0 0
        %677 = vmatprep.mubr.bf16.mxu0 0
        %678 = vmatmul.mubr.bf16.gmra.mrb[0].mxu0 %v621
        %v679 = vpop.f32.mrb[0].mxu0
        %v680 = vadd.f32 %v532, %v679
        %v681 = vpop.f32.mrb[0].mxu0
        %v682 = vadd.f32 %v532, %v681
        %v683 = vpop.f32.mrb[0].mxu0
        %v684 = vadd.f32 %v537, %v683
        %v685 = vpop.f32.mrb[0].mxu0
        %v686 = vadd.f32 %v537, %v685
        %687 = vmatprep.mubr.bf16.mxu0 0
        %688 = vmatmul.mubr.bf16.gmra.mrb[0].mxu0 %v624
        %v689 = vpop.f32.mrb[0].mxu0
        %v690 = vadd.f32 %v542, %v689
        %v691 = vpop.f32.mrb[0].mxu0
        %v692 = vadd.f32 %v542, %v691
        %v693 = vpop.f32.mrb[0].mxu0
        %v694 = vadd.f32 %v547, %v693
        %v695 = vpop.f32.mrb[0].mxu0
        %v696 = vadd.f32 %v547, %v695
        %697 = vmatprep.mubr.bf16.mxu0 0
        %698 = vmatmul.mubr.bf16.gmra.mrb[0].mxu0 %v627
        %v699 = vpop.f32.mrb[0].mxu0
        %v700 = vadd.f32 %v552, %v699
        %v701 = vpop.f32.mrb[0].mxu0
        %v702 = vadd.f32 %v552, %v701
        %v703 = vpop.f32.mrb[0].mxu0
        %v704 = vadd.f32 %v557, %v703
        %v705 = vpop.f32.mrb[0].mxu0
        %v706 = vadd.f32 %v557, %v705
        %707 = vmatprep.mubr.bf16.mxu0 0
        %708 = vmatmul.mubr.bf16.gmra.mrb[0].mxu0 %v630
        %v709 = vpop.f32.mrb[0].mxu0
        %v710 = vadd.f32 %v562, %v709
        %v711 = vpop.f32.mrb[0].mxu0
        %v712 = vadd.f32 %v562, %v711
        %v713 = vpop.f32.mrb[0].mxu0
        %v714 = vadd.f32 %v567, %v713
        %v715 = vpop.f32.mrb[0].mxu0
        %v716 = vadd.f32 %v567, %v715
        %717 = vmatprep.mubr.bf16.mxu0 0
        %718 = vmatmul.mubr.bf16.gmra.mrb[0].mxu0 %v633
        %v719 = vpop.f32.mrb[0].mxu0
        %v720 = vadd.f32 %v572, %v719
        %v721 = vpop.f32.mrb[0].mxu0
        %v722 = vadd.f32 %v572, %v721
        %v723 = vpop.f32.mrb[0].mxu0
        %v724 = vadd.f32 %v577, %v723
        %v725 = vpop.f32.mrb[0].mxu0
        %v726 = vadd.f32 %v577, %v725
        %727 = vmatprep.mubr.bf16.mxu0 0
        %728 = vmatmul.mubr.bf16.gmra.mrb[0].mxu0 %v636
        %v729 = vpop.f32.mrb[0].mxu0
        %v730 = vadd.f32 %v582, %v729
        %v731 = vpop.f32.mrb[0].mxu0
        %v732 = vadd.f32 %v582, %v731
        %v733 = vpop.f32.mrb[0].mxu0
        %v734 = vadd.f32 %v587, %v733
        %v735 = vpop.f32.mrb[0].mxu0
        %v736 = vadd.f32 %v587, %v735
        %737 = vdwg.mxu0
        %v738 = vpack.c.bf16 %v684, %v680
        %v739 = vpack.c.bf16 %v686, %v682
        %v740 = vpack.c.bf16 %v694, %v690
        %v741 = vpack.c.bf16 %v696, %v692
        %v742 = vpack.c.bf16 %v704, %v700
        %v743 = vpack.c.bf16 %v706, %v702
        %v744 = vpack.c.bf16 %v714, %v710
        %v745 = vpack.c.bf16 %v716, %v712
        %v746 = vpack.c.bf16 %v724, %v720
        %v747 = vpack.c.bf16 %v726, %v722
        %v748 = vpack.c.bf16 %v734, %v730
        %v749 = vpack.c.bf16 %v736, %v732
        %v750 = vld [vmem:[%s4] sm:$0xf]
        %v751 = vld [vmem:[%s4 + $0x4] sm:$0xf]
        %v752 = vld [vmem:[%s4 + $0x8] sm:$0xf]
        %v753 = vld [vmem:[%s4 + $0xc] sm:$0xf]
        %v754 = vld [vmem:[%s4 + $0x10] sm:$0xf]
        %v755 = vld [vmem:[%s4 + $0x14] sm:$0xf]
        %v756 = vld [vmem:[%s4 + $0x18] sm:$0xf]
        %v757 = vld [vmem:[%s4 + $0x1c] sm:$0xf]
        %v758 = vld [vmem:[%s4 + $0x20] sm:$0xf]
        %v759 = vld [vmem:[%s4 + $0x24] sm:$0xf]
        %v760 = vld [vmem:[%s4 + $0x28] sm:$0xf]
        %v761 = vld [vmem:[%s4 + $0x2c] sm:$0xf]
        %v762 = vld [vmem:[%s5] sm:$0xff]
        %v763 = vld [vmem:[%s5 + $0x8] sm:$0xff]
        %v764 = vld [vmem:[%s5 + $0x10] sm:$0xff]
        %v765 = vld [vmem:[%s5 + $0x18] sm:$0xff]
        %v766 = vld [vmem:[%s5 + $0x20] sm:$0xff]
        %v767 = vld [vmem:[%s5 + $0x28] sm:$0xff]
        %v768 = vld [vmem:[%s5 + $0x30] sm:$0xff]
        %v769 = vld [vmem:[%s5 + $0x38] sm:$0xff]
        %v770 = vld [vmem:[%s5 + $0x40] sm:$0xff]
        %v771 = vld [vmem:[%s5 + $0x48] sm:$0xff]
        %v772 = vld [vmem:[%s5 + $0x50] sm:$0xff]
        %v773 = vld [vmem:[%s5 + $0x58] sm:$0xff]
        %775 = vset.pattern.permute.xlu0 0
        %776 = vperm.xlu0 %775, %v762
        %v777 = vpop.permute.xlu0 %776
        %780 = vset.pattern.permute.xlu0 0
        %781 = vperm.xlu0 %780, %v763
        %v782 = vpop.permute.xlu0 %781
        %785 = vset.pattern.permute.xlu0 0
        %786 = vperm.xlu0 %785, %v764
        %v787 = vpop.permute.xlu0 %786
        %790 = vset.pattern.permute.xlu0 0
        %791 = vperm.xlu0 %790, %v765
        %v792 = vpop.permute.xlu0 %791
        %795 = vset.pattern.permute.xlu0 0
        %796 = vperm.xlu0 %795, %v766
        %v797 = vpop.permute.xlu0 %796
        %800 = vset.pattern.permute.xlu0 0
        %801 = vperm.xlu0 %800, %v767
        %v802 = vpop.permute.xlu0 %801
        %805 = vset.pattern.permute.xlu0 0
        %806 = vperm.xlu0 %805, %v768
        %v807 = vpop.permute.xlu0 %806
        %810 = vset.pattern.permute.xlu0 0
        %811 = vperm.xlu0 %810, %v769
        %v812 = vpop.permute.xlu0 %811
        %815 = vset.pattern.permute.xlu0 0
        %816 = vperm.xlu0 %815, %v770
        %v817 = vpop.permute.xlu0 %816
        %820 = vset.pattern.permute.xlu0 0
        %821 = vperm.xlu0 %820, %v771
        %v822 = vpop.permute.xlu0 %821
        %825 = vset.pattern.permute.xlu0 0
        %826 = vperm.xlu0 %825, %v772
        %v827 = vpop.permute.xlu0 %826
        %830 = vset.pattern.permute.xlu0 0
        %831 = vperm.xlu0 %830, %v773
        %v832 = vpop.permute.xlu0 %831
        %v846 = vunpack.c.l.b16 %v750
        %v847 = vunpack.c.l.b16 %v751
        %v848 = vunpack.c.l.b16 %v752
        %v849 = vunpack.c.l.b16 %v753
        %v850 = vunpack.c.l.b16 %v754
        %v851 = vunpack.c.l.b16 %v755
        %v852 = vunpack.c.l.b16 %v756
        %v853 = vunpack.c.l.b16 %v757
        %v854 = vunpack.c.l.b16 %v758
        %v855 = vunpack.c.l.b16 %v759
        %v856 = vunpack.c.l.b16 %v760
        %v857 = vunpack.c.l.b16 %v761
        %v858 = vpack.c.b16 %v847, %v846
        %v859 = vpack.c.b16 %v849, %v848
        %v860 = vpack.c.b16 %v851, %v850
        %v861 = vpack.c.b16 %v853, %v852
        %v862 = vpack.c.b16 %v855, %v854
        %v863 = vpack.c.b16 %v857, %v856
        %vm864 = vcmask 48128
        %v866 = vsel %vm864, %v858, 0
        %v869 = vsel %vm864, %v859, 0
        %v872 = vsel %vm864, %v860, 0
        %v875 = vsel %vm864, %v861, 0
        %v878 = vsel %vm864, %v862, 0
        %v881 = vsel %vm864, %v863, 0
        %vm883 = vcmask 1042432
        %v885 = vsel %vm883, %v502, 0
        %v888 = vsel %vm883, %v504, 0
        %890 = vmatprep.subr.bf16.mxu0 %v888
        %891 = vmatpush1.bf16.msra.mxu0 %v885
        %892 = vmatprep.subr.bf16.mxu0 0
        %893 = vmatpush1.bf16.msra.mxu0 0
        %894 = vmatprep.subr.bf16.mxu0 0
        %895 = vmatpush1.bf16.msra.mxu0 0
        %896 = vmatprep.subr.bf16.mxu0 0
        %897 = vmatpush1.bf16.msra.mxu0 0
        %898 = vmatprep.subr.bf16.mxu0 0
        %899 = vmatpush1.bf16.msra.mxu0 0
        %900 = vmatprep.subr.bf16.mxu0 0
        %901 = vmatpush1.bf16.msra.mxu0 0
        %902 = vmatprep.subr.bf16.mxu0 0
        %903 = vmatpush1.bf16.msra.mxu0 0
        %904 = vmatprep.subr.bf16.mxu0 0
        %905 = vmatpush1.bf16.msra.mxu0 0
        %906 = vmatprep.subr.bf16.mxu0 0
        %907 = vmatpush1.bf16.msra.mxu0 0
        %908 = vmatprep.subr.bf16.mxu0 0
        %909 = vmatpush1.bf16.msra.mxu0 0
        %910 = vmatprep.subr.bf16.mxu0 0
        %911 = vmatpush1.bf16.msra.mxu0 0
        %912 = vmatprep.subr.bf16.mxu0 0
        %913 = vmatpush1.bf16.msra.mxu0 0
        %914 = vmatprep.subr.bf16.mxu0 0
        %915 = vmatpush1.bf16.msra.mxu0 0
        %916 = vmatprep.subr.bf16.mxu0 0
        %917 = vmatpush1.bf16.msra.mxu0 0
        %918 = vmatprep.subr.bf16.mxu0 0
        %919 = vmatpush1.bf16.msra.mxu0 0
        %920 = vmatprep.subr.bf16.mxu0 0
        %921 = vmatpush1.bf16.msra.mxu0 0
        %922 = vmatprep.mubr.bf16.mxu0 0
        %923 = vmatmul.mubr.bf16.gmra.mrb[0].mxu0 %v866
        %v924 = vpop.f32.mrb[0].mxu0
        %v925 = vadd.f32 %v777, %v924
        %v926 = vpop.f32.mrb[0].mxu0
        %v927 = vadd.f32 %v777, %v926
        %v928 = vpop.f32.mrb[0].mxu0
        %v929 = vadd.f32 %v782, %v928
        %v930 = vpop.f32.mrb[0].mxu0
        %v931 = vadd.f32 %v782, %v930
        %932 = vmatprep.mubr.bf16.mxu0 0
        %933 = vmatmul.mubr.bf16.gmra.mrb[0].mxu0 %v869
        %v934 = vpop.f32.mrb[0].mxu0
        %v935 = vadd.f32 %v787, %v934
        %v936 = vpop.f32.mrb[0].mxu0
        %v937 = vadd.f32 %v787, %v936
        %v938 = vpop.f32.mrb[0].mxu0
        %v939 = vadd.f32 %v792, %v938
        %v940 = vpop.f32.mrb[0].mxu0
        %v941 = vadd.f32 %v792, %v940
        %942 = vmatprep.mubr.bf16.mxu0 0
        %943 = vmatmul.mubr.bf16.gmra.mrb[0].mxu0 %v872
        %v944 = vpop.f32.mrb[0].mxu0
        %v945 = vadd.f32 %v797, %v944
        %v946 = vpop.f32.mrb[0].mxu0
        %v947 = vadd.f32 %v797, %v946
        %v948 = vpop.f32.mrb[0].mxu0
        %v949 = vadd.f32 %v802, %v948
        %v950 = vpop.f32.mrb[0].mxu0
        %v951 = vadd.f32 %v802, %v950
        %952 = vmatprep.mubr.bf16.mxu0 0
        %953 = vmatmul.mubr.bf16.gmra.mrb[0].mxu0 %v875
        %v954 = vpop.f32.mrb[0].mxu0
        %v955 = vadd.f32 %v807, %v954
        %v956 = vpop.f32.mrb[0].mxu0
        %v957 = vadd.f32 %v807, %v956
        %v958 = vpop.f32.mrb[0].mxu0
        %v959 = vadd.f32 %v812, %v958
        %v960 = vpop.f32.mrb[0].mxu0
        %v961 = vadd.f32 %v812, %v960
        %962 = vmatprep.mubr.bf16.mxu0 0
        %963 = vmatmul.mubr.bf16.gmra.mrb[0].mxu0 %v878
        %v964 = vpop.f32.mrb[0].mxu0
        %v965 = vadd.f32 %v817, %v964
        %v966 = vpop.f32.mrb[0].mxu0
        %v967 = vadd.f32 %v817, %v966
        %v968 = vpop.f32.mrb[0].mxu0
        %v969 = vadd.f32 %v822, %v968
        %v970 = vpop.f32.mrb[0].mxu0
        %v971 = vadd.f32 %v822, %v970
        %972 = vmatprep.mubr.bf16.mxu0 0
        %973 = vmatmul.mubr.bf16.gmra.mrb[0].mxu0 %v881
        %v974 = vpop.f32.mrb[0].mxu0
        %v975 = vadd.f32 %v827, %v974
        %v976 = vpop.f32.mrb[0].mxu0
        %v977 = vadd.f32 %v827, %v976
        %v978 = vpop.f32.mrb[0].mxu0
        %v979 = vadd.f32 %v832, %v978
        %v980 = vpop.f32.mrb[0].mxu0
        %v981 = vadd.f32 %v832, %v980
        %982 = vdwg.mxu0
        %v983 = vpack.c.bf16 %v929, %v925
        %v984 = vpack.c.bf16 %v931, %v927
        %v985 = vpack.c.bf16 %v939, %v935
        %v986 = vpack.c.bf16 %v941, %v937
        %v987 = vpack.c.bf16 %v949, %v945
        %v988 = vpack.c.bf16 %v951, %v947
        %v989 = vpack.c.bf16 %v959, %v955
        %v990 = vpack.c.bf16 %v961, %v957
        %v991 = vpack.c.bf16 %v969, %v965
        %v992 = vpack.c.bf16 %v971, %v967
        %v993 = vpack.c.bf16 %v979, %v975
        %v994 = vpack.c.bf16 %v981, %v977
        %v995 = vld [vmem:[%s8] sm:$0xf]
        %v996 = vld [vmem:[%s9] sm:$0xf]
        %v997 = vld [vmem:[%s9 + $0x4] sm:$0xf]
        %v998 = vld [vmem:[%s9 + $0x8] sm:$0xf]
        %v999 = vld [vmem:[%s9 + $0xc] sm:$0xf]
        %v1000 = vld [vmem:[%s6] sm:$0xf]
        %v1001 = vld [vmem:[%s6 + $0x4] sm:$0xf]
        %v1002 = vld [vmem:[%s6 + $0x8] sm:$0xf]
        %v1003 = vld [vmem:[%s6 + $0xc] sm:$0xf]
        %v1004 = vld [vmem:[%s7] sm:$0xff]
        %v1005 = vld [vmem:[%s7 + $0x8] sm:$0xff]
        %v1006 = vld [vmem:[%s7 + $0x10] sm:$0xff]
        %v1007 = vld [vmem:[%s7 + $0x18] sm:$0xff]
        %v1008 = vmul.bf16 %v738, %v987
        %v1009 = vmul.bf16 %v740, %v989
        %vm1010 = vcmask 261120
        %v1012 = vsel %vm1010, %v995, 0
        %1014 = vmatprep.subr.bf16.mxu0 0
        %1015 = vmatpush1.bf16.msra.mxu0 %v1008
        %1016 = vmatprep.subr.bf16.mxu0 0
        %1017 = vmatpush1.bf16.msra.mxu0 %v1009
        %1018 = vmatprep.subr.bf16.mxu0 0
        %1019 = vmatpush1.bf16.msra.mxu0 0
        %1020 = vmatprep.subr.bf16.mxu0 0
        %1021 = vmatpush1.bf16.msra.mxu0 0
        %1022 = vmatprep.subr.bf16.mxu0 0
        %1023 = vmatpush1.bf16.msra.mxu0 0
        %1024 = vmatprep.subr.bf16.mxu0 0
        %1025 = vmatpush1.bf16.msra.mxu0 0
        %1026 = vmatprep.subr.bf16.mxu0 0
        %1027 = vmatpush1.bf16.msra.mxu0 0
        %1028 = vmatprep.subr.bf16.mxu0 0
        %1029 = vmatpush1.bf16.msra.mxu0 0
        %1030 = vmatprep.subr.bf16.mxu0 0
        %1031 = vmatpush1.bf16.msra.mxu0 0
        %1032 = vmatprep.subr.bf16.mxu0 0
        %1033 = vmatpush1.bf16.msra.mxu0 0
        %1034 = vmatprep.subr.bf16.mxu0 0
        %1035 = vmatpush1.bf16.msra.mxu0 0
        %1036 = vmatprep.subr.bf16.mxu0 0
        %1037 = vmatpush1.bf16.msra.mxu0 0
        %1038 = vmatprep.subr.bf16.mxu0 0
        %1039 = vmatpush1.bf16.msra.mxu0 0
        %1040 = vmatprep.subr.bf16.mxu0 0
        %1041 = vmatpush1.bf16.msra.mxu0 0
        %1042 = vmatprep.subr.bf16.mxu0 0
        %1043 = vmatpush1.bf16.msra.mxu0 0
        %1044 = vmatprep.subr.bf16.mxu0 0
        %1045 = vmatpush1.bf16.msra.mxu0 0
        %1046 = vmatprep.mubr.bf16.mxu0 0
        %1047 = vmatmul.mubr.bf16.gmra.mrb[0].mxu0 %v1012
        %v1048 = vpop.f32.mrb[0].mxu0
        %v1049 = vadd.f32 0.0, %v1048
        %v1050 = vpop.f32.mrb[0].mxu0
        %v1051 = vpop.f32.mrb[0].mxu0
        %v1052 = vpop.f32.mrb[0].mxu0
        %1053 = vdwg.mxu0
        %v1054 = vmul.bf16 %v738, %v988
        %v1055 = vmul.bf16 %v740, %v990
        %1056 = vmatprep.subr.bf16.mxu0 0
        %1057 = vmatpush1.bf16.msra.mxu0 %v1054
        %1058 = vmatprep.subr.bf16.mxu0 0
        %1059 = vmatpush1.bf16.msra.mxu0 %v1055
        %1060 = vmatprep.subr.bf16.mxu0 0
        %1061 = vmatpush1.bf16.msra.mxu0 0
        %1062 = vmatprep.subr.bf16.mxu0 0
        %1063 = vmatpush1.bf16.msra.mxu0 0
        %1064 = vmatprep.subr.bf16.mxu0 0
        %1065 = vmatpush1.bf16.msra.mxu0 0
        %1066 = vmatprep.subr.bf16.mxu0 0
        %1067 = vmatpush1.bf16.msra.mxu0 0
        %1068 = vmatprep.subr.bf16.mxu0 0
        %1069 = vmatpush1.bf16.msra.mxu0 0
        %1070 = vmatprep.subr.bf16.mxu0 0
        %1071 = vmatpush1.bf16.msra.mxu0 0
        %1072 = vmatprep.subr.bf16.mxu0 0
        %1073 = vmatpush1.bf16.msra.mxu0 0
        %1074 = vmatprep.subr.bf16.mxu0 0
        %1075 = vmatpush1.bf16.msra.mxu0 0
        %1076 = vmatprep.subr.bf16.mxu0 0
        %1077 = vmatpush1.bf16.msra.mxu0 0
        %1078 = vmatprep.subr.bf16.mxu0 0
        %1079 = vmatpush1.bf16.msra.mxu0 0
        %1080 = vmatprep.subr.bf16.mxu0 0
        %1081 = vmatpush1.bf16.msra.mxu0 0
        %1082 = vmatprep.subr.bf16.mxu0 0
        %1083 = vmatpush1.bf16.msra.mxu0 0
        %1084 = vmatprep.subr.bf16.mxu0 0
        %1085 = vmatpush1.bf16.msra.mxu0 0
        %1086 = vmatprep.subr.bf16.mxu0 0
        %1087 = vmatpush1.bf16.msra.mxu0 0
        %1088 = vmatprep.mubr.bf16.mxu0 0
        %1089 = vmatmul.mubr.bf16.gmra.mrb[0].mxu0 %v1012
        %v1090 = vpop.f32.mrb[0].mxu0
        %v1091 = vadd.f32 0.0, %v1090
        %v1092 = vpop.f32.mrb[0].mxu0
        %v1093 = vpop.f32.mrb[0].mxu0
        %v1094 = vpop.f32.mrb[0].mxu0
        %1095 = vdwg.mxu0
        %v1096 = vsub.f32 %v1091, %v1049
        %v1097 = vmul.f32 %v1096, 1.442695
        %v1098 = vpow.pop %v1097
        %v1099 = vadd.f32 %v1098, 1.0
        %v1100 = vrcp.pop %v1099
        %v1101 = vsub.f32 1.0, %v1100
        %v1102 = vpack.c.bf16 %v1100, %v1100
        %v1107 = vunpack.c.l.b16 %v996
        %v1108 = vunpack.c.l.b16 %v997
        %v1109 = vunpack.c.l.b16 %v998
        %v1110 = vunpack.c.l.b16 %v999
        %v1111 = vpack.c.b16 %v1108, %v1107
        %v1112 = vpack.c.b16 %v1110, %v1109
        %vm1113 = vcmask 64512
        %v1115 = vsel %vm1113, %v1111, 0
        %v1118 = vsel %vm1113, %v1112, 0
        %vm1120 = vcmask 1043456
        %v1122 = vsel %vm1120, %v1102, 0
        %1124 = vmatprep.subr.bf16.mxu0 0
        %1125 = vmatpush1.bf16.msra.mxu0 %v1122
        %1126 = vmatprep.subr.bf16.mxu0 0
        %1127 = vmatpush1.bf16.msra.mxu0 0
        %1128 = vmatprep.subr.bf16.mxu0 0
        %1129 = vmatpush1.bf16.msra.mxu0 0
        %1130 = vmatprep.subr.bf16.mxu0 0
        %1131 = vmatpush1.bf16.msra.mxu0 0
        %1132 = vmatprep.subr.bf16.mxu0 0
        %1133 = vmatpush1.bf16.msra.mxu0 0
        %1134 = vmatprep.subr.bf16.mxu0 0
        %1135 = vmatpush1.bf16.msra.mxu0 0
        %1136 = vmatprep.subr.bf16.mxu0 0
        %1137 = vmatpush1.bf16.msra.mxu0 0
        %1138 = vmatprep.subr.bf16.mxu0 0
        %1139 = vmatpush1.bf16.msra.mxu0 0
        %1140 = vmatprep.subr.bf16.mxu0 0
        %1141 = vmatpush1.bf16.msra.mxu0 0
        %1142 = vmatprep.subr.bf16.mxu0 0
        %1143 = vmatpush1.bf16.msra.mxu0 0
        %1144 = vmatprep.subr.bf16.mxu0 0
        %1145 = vmatpush1.bf16.msra.mxu0 0
        %1146 = vmatprep.subr.bf16.mxu0 0
        %1147 = vmatpush1.bf16.msra.mxu0 0
        %1148 = vmatprep.subr.bf16.mxu0 0
        %1149 = vmatpush1.bf16.msra.mxu0 0
        %1150 = vmatprep.subr.bf16.mxu0 0
        %1151 = vmatpush1.bf16.msra.mxu0 0
        %1152 = vmatprep.subr.bf16.mxu0 0
        %1153 = vmatpush1.bf16.msra.mxu0 0
        %1154 = vmatprep.subr.bf16.mxu0 0
        %1155 = vmatpush1.bf16.msra.mxu0 0
        %1156 = vmatprep.mubr.bf16.mxu0 0
        %1157 = vmatmul.mubr.bf16.gmra.mrb[0].mxu0 %v1115
        %v1158 = vpop.f32.mrb[0].mxu0
        %v1159 = vadd.f32 0.0, %v1158
        %v1160 = vpop.f32.mrb[0].mxu0
        %v1161 = vpop.f32.mrb[0].mxu0
        %v1162 = vadd.f32 0.0, %v1161
        %v1163 = vpop.f32.mrb[0].mxu0
        %1164 = vmatprep.mubr.bf16.mxu0 0
        %1165 = vmatmul.mubr.bf16.gmra.mrb[0].mxu0 %v1118
        %v1166 = vpop.f32.mrb[0].mxu0
        %v1167 = vadd.f32 0.0, %v1166
        %v1168 = vpop.f32.mrb[0].mxu0
        %v1169 = vpop.f32.mrb[0].mxu0
        %v1170 = vadd.f32 0.0, %v1169
        %v1171 = vpop.f32.mrb[0].mxu0
        %1172 = vdwg.mxu0
        %v1173 = vunpack.c.l.bf16 %v991
        %v1174 = vunpack.c.h.bf16 %v991
        %v1175 = vunpack.c.l.bf16 %v993
        %v1176 = vunpack.c.h.bf16 %v993
        %v1177 = vmul.f32 %v1159, %v1173
        %v1178 = vmul.f32 %v1162, %v1174
        %v1179 = vmul.f32 %v1167, %v1175
        %v1180 = vmul.f32 %v1170, %v1176
        %v1181 = vpack.c.bf16 %v1101, %v1101
        %v1183 = vsel %vm1120, %v1181, 0
        %1185 = vmatprep.subr.bf16.mxu0 0
        %1186 = vmatpush1.bf16.msra.mxu0 %v1183
        %1187 = vmatprep.subr.bf16.mxu0 0
        %1188 = vmatpush1.bf16.msra.mxu0 0
        %1189 = vmatprep.subr.bf16.mxu0 0
        %1190 = vmatpush1.bf16.msra.mxu0 0
        %1191 = vmatprep.subr.bf16.mxu0 0
        %1192 = vmatpush1.bf16.msra.mxu0 0
        %1193 = vmatprep.subr.bf16.mxu0 0
        %1194 = vmatpush1.bf16.msra.mxu0 0
        %1195 = vmatprep.subr.bf16.mxu0 0
        %1196 = vmatpush1.bf16.msra.mxu0 0
        %1197 = vmatprep.subr.bf16.mxu0 0
        %1198 = vmatpush1.bf16.msra.mxu0 0
        %1199 = vmatprep.subr.bf16.mxu0 0
        %1200 = vmatpush1.bf16.msra.mxu0 0
        %1201 = vmatprep.subr.bf16.mxu0 0
        %1202 = vmatpush1.bf16.msra.mxu0 0
        %1203 = vmatprep.subr.bf16.mxu0 0
        %1204 = vmatpush1.bf16.msra.mxu0 0
        %1205 = vmatprep.subr.bf16.mxu0 0
        %1206 = vmatpush1.bf16.msra.mxu0 0
        %1207 = vmatprep.subr.bf16.mxu0 0
        %1208 = vmatpush1.bf16.msra.mxu0 0
        %1209 = vmatprep.subr.bf16.mxu0 0
        %1210 = vmatpush1.bf16.msra.mxu0 0
        %1211 = vmatprep.subr.bf16.mxu0 0
        %1212 = vmatpush1.bf16.msra.mxu0 0
        %1213 = vmatprep.subr.bf16.mxu0 0
        %1214 = vmatpush1.bf16.msra.mxu0 0
        %1215 = vmatprep.subr.bf16.mxu0 0
        %1216 = vmatpush1.bf16.msra.mxu0 0
        %1217 = vmatprep.mubr.bf16.mxu0 0
        %1218 = vmatmul.mubr.bf16.gmra.mrb[0].mxu0 %v1115
        %v1219 = vpop.f32.mrb[0].mxu0
        %v1220 = vadd.f32 0.0, %v1219
        %v1221 = vpop.f32.mrb[0].mxu0
        %v1222 = vpop.f32.mrb[0].mxu0
        %v1223 = vadd.f32 0.0, %v1222
        %v1224 = vpop.f32.mrb[0].mxu0
        %1225 = vmatprep.mubr.bf16.mxu0 0
        %1226 = vmatmul.mubr.bf16.gmra.mrb[0].mxu0 %v1118
        %v1227 = vpop.f32.mrb[0].mxu0
        %v1228 = vadd.f32 0.0, %v1227
        %v1229 = vpop.f32.mrb[0].mxu0
        %v1230 = vpop.f32.mrb[0].mxu0
        %v1231 = vadd.f32 0.0, %v1230
        %v1232 = vpop.f32.mrb[0].mxu0
        %1233 = vdwg.mxu0
        %v1234 = vunpack.c.l.bf16 %v992
        %v1235 = vunpack.c.h.bf16 %v992
        %v1236 = vunpack.c.l.bf16 %v994
        %v1237 = vunpack.c.h.bf16 %v994
        %v1238 = vmul.f32 %v1220, %v1234
        %v1239 = vmul.f32 %v1223, %v1235
        %v1240 = vmul.f32 %v1228, %v1236
        %v1241 = vmul.f32 %v1231, %v1237
        %v1242 = vadd.f32 %v1177, %v1238
        %v1243 = vadd.f32 %v1178, %v1239
        %v1244 = vadd.f32 %v1179, %v1240
        %v1245 = vadd.f32 %v1180, %v1241
        %v1246 = vmul.bf16 %v983, %v742
        %v1247 = vmul.bf16 %v985, %v744
        %1248 = vmatprep.subr.bf16.mxu0 0
        %1249 = vmatpush1.bf16.msra.mxu0 %v1246
        %1250 = vmatprep.subr.bf16.mxu0 0
        %1251 = vmatpush1.bf16.msra.mxu0 %v1247
        %1252 = vmatprep.subr.bf16.mxu0 0
        %1253 = vmatpush1.bf16.msra.mxu0 0
        %1254 = vmatprep.subr.bf16.mxu0 0
        %1255 = vmatpush1.bf16.msra.mxu0 0
        %1256 = vmatprep.subr.bf16.mxu0 0
        %1257 = vmatpush1.bf16.msra.mxu0 0
        %1258 = vmatprep.subr.bf16.mxu0 0
        %1259 = vmatpush1.bf16.msra.mxu0 0
        %1260 = vmatprep.subr.bf16.mxu0 0
        %1261 = vmatpush1.bf16.msra.mxu0 0
        %1262 = vmatprep.subr.bf16.mxu0 0
        %1263 = vmatpush1.bf16.msra.mxu0 0
        %1264 = vmatprep.subr.bf16.mxu0 0
        %1265 = vmatpush1.bf16.msra.mxu0 0
        %1266 = vmatprep.subr.bf16.mxu0 0
        %1267 = vmatpush1.bf16.msra.mxu0 0
        %1268 = vmatprep.subr.bf16.mxu0 0
        %1269 = vmatpush1.bf16.msra.mxu0 0
        %1270 = vmatprep.subr.bf16.mxu0 0
        %1271 = vmatpush1.bf16.msra.mxu0 0
        %1272 = vmatprep.subr.bf16.mxu0 0
        %1273 = vmatpush1.bf16.msra.mxu0 0
        %1274 = vmatprep.subr.bf16.mxu0 0
        %1275 = vmatpush1.bf16.msra.mxu0 0
        %1276 = vmatprep.subr.bf16.mxu0 0
        %1277 = vmatpush1.bf16.msra.mxu0 0
        %1278 = vmatprep.subr.bf16.mxu0 0
        %1279 = vmatpush1.bf16.msra.mxu0 0
        %1280 = vmatprep.mubr.bf16.mxu0 0
        %1281 = vmatmul.mubr.bf16.gmra.mrb[0].mxu0 %v1012
        %v1282 = vpop.f32.mrb[0].mxu0
        %v1283 = vadd.f32 0.0, %v1282
        %v1284 = vpop.f32.mrb[0].mxu0
        %v1285 = vpop.f32.mrb[0].mxu0
        %v1286 = vpop.f32.mrb[0].mxu0
        %1287 = vdwg.mxu0
        %v1288 = vmul.bf16 %v983, %v743
        %v1289 = vmul.bf16 %v985, %v745
        %1290 = vmatprep.subr.bf16.mxu0 0
        %1291 = vmatpush1.bf16.msra.mxu0 %v1288
        %1292 = vmatprep.subr.bf16.mxu0 0
        %1293 = vmatpush1.bf16.msra.mxu0 %v1289
        %1294 = vmatprep.subr.bf16.mxu0 0
        %1295 = vmatpush1.bf16.msra.mxu0 0
        %1296 = vmatprep.subr.bf16.mxu0 0
        %1297 = vmatpush1.bf16.msra.mxu0 0
        %1298 = vmatprep.subr.bf16.mxu0 0
        %1299 = vmatpush1.bf16.msra.mxu0 0
        %1300 = vmatprep.subr.bf16.mxu0 0
        %1301 = vmatpush1.bf16.msra.mxu0 0
        %1302 = vmatprep.subr.bf16.mxu0 0
        %1303 = vmatpush1.bf16.msra.mxu0 0
        %1304 = vmatprep.subr.bf16.mxu0 0
        %1305 = vmatpush1.bf16.msra.mxu0 0
        %1306 = vmatprep.subr.bf16.mxu0 0
        %1307 = vmatpush1.bf16.msra.mxu0 0
        %1308 = vmatprep.subr.bf16.mxu0 0
        %1309 = vmatpush1.bf16.msra.mxu0 0
        %1310 = vmatprep.subr.bf16.mxu0 0
        %1311 = vmatpush1.bf16.msra.mxu0 0
        %1312 = vmatprep.subr.bf16.mxu0 0
        %1313 = vmatpush1.bf16.msra.mxu0 0
        %1314 = vmatprep.subr.bf16.mxu0 0
        %1315 = vmatpush1.bf16.msra.mxu0 0
        %1316 = vmatprep.subr.bf16.mxu0 0
        %1317 = vmatpush1.bf16.msra.mxu0 0
        %1318 = vmatprep.subr.bf16.mxu0 0
        %1319 = vmatpush1.bf16.msra.mxu0 0
        %1320 = vmatprep.subr.bf16.mxu0 0
        %1321 = vmatpush1.bf16.msra.mxu0 0
        %1322 = vmatprep.mubr.bf16.mxu0 0
        %1323 = vmatmul.mubr.bf16.gmra.mrb[0].mxu0 %v1012
        %v1324 = vpop.f32.mrb[0].mxu0
        %v1325 = vadd.f32 0.0, %v1324
        %v1326 = vpop.f32.mrb[0].mxu0
        %v1327 = vpop.f32.mrb[0].mxu0
        %v1328 = vpop.f32.mrb[0].mxu0
        %1329 = vdwg.mxu0
        %v1330 = vsub.f32 %v1325, %v1283
        %v1331 = vmul.f32 %v1330, 1.442695
        %v1332 = vpow.pop %v1331
        %v1333 = vadd.f32 %v1332, 1.0
        %v1334 = vrcp.pop %v1333
        %v1335 = vsub.f32 1.0, %v1334
        %v1336 = vpack.c.bf16 %v1334, %v1334
        %v1338 = vsel %vm1120, %v1336, 0
        %1340 = vmatprep.subr.bf16.mxu0 0
        %1341 = vmatpush1.bf16.msra.mxu0 %v1338
        %1342 = vmatprep.subr.bf16.mxu0 0
        %1343 = vmatpush1.bf16.msra.mxu0 0
        %1344 = vmatprep.subr.bf16.mxu0 0
        %1345 = vmatpush1.bf16.msra.mxu0 0
        %1346 = vmatprep.subr.bf16.mxu0 0
        %1347 = vmatpush1.bf16.msra.mxu0 0
        %1348 = vmatprep.subr.bf16.mxu0 0
        %1349 = vmatpush1.bf16.msra.mxu0 0
        %1350 = vmatprep.subr.bf16.mxu0 0
        %1351 = vmatpush1.bf16.msra.mxu0 0
        %1352 = vmatprep.subr.bf16.mxu0 0
        %1353 = vmatpush1.bf16.msra.mxu0 0
        %1354 = vmatprep.subr.bf16.mxu0 0
        %1355 = vmatpush1.bf16.msra.mxu0 0
        %1356 = vmatprep.subr.bf16.mxu0 0
        %1357 = vmatpush1.bf16.msra.mxu0 0
        %1358 = vmatprep.subr.bf16.mxu0 0
        %1359 = vmatpush1.bf16.msra.mxu0 0
        %1360 = vmatprep.subr.bf16.mxu0 0
        %1361 = vmatpush1.bf16.msra.mxu0 0
        %1362 = vmatprep.subr.bf16.mxu0 0
        %1363 = vmatpush1.bf16.msra.mxu0 0
        %1364 = vmatprep.subr.bf16.mxu0 0
        %1365 = vmatpush1.bf16.msra.mxu0 0
        %1366 = vmatprep.subr.bf16.mxu0 0
        %1367 = vmatpush1.bf16.msra.mxu0 0
        %1368 = vmatprep.subr.bf16.mxu0 0
        %1369 = vmatpush1.bf16.msra.mxu0 0
        %1370 = vmatprep.subr.bf16.mxu0 0
        %1371 = vmatpush1.bf16.msra.mxu0 0
        %1372 = vmatprep.mubr.bf16.mxu0 0
        %1373 = vmatmul.mubr.bf16.gmra.mrb[0].mxu0 %v1115
        %v1374 = vpop.f32.mrb[0].mxu0
        %v1375 = vadd.f32 0.0, %v1374
        %v1376 = vpop.f32.mrb[0].mxu0
        %v1377 = vpop.f32.mrb[0].mxu0
        %v1378 = vadd.f32 0.0, %v1377
        %v1379 = vpop.f32.mrb[0].mxu0
        %1380 = vmatprep.mubr.bf16.mxu0 0
        %1381 = vmatmul.mubr.bf16.gmra.mrb[0].mxu0 %v1118
        %v1382 = vpop.f32.mrb[0].mxu0
        %v1383 = vadd.f32 0.0, %v1382
        %v1384 = vpop.f32.mrb[0].mxu0
        %v1385 = vpop.f32.mrb[0].mxu0
        %v1386 = vadd.f32 0.0, %v1385
        %v1387 = vpop.f32.mrb[0].mxu0
        %1388 = vdwg.mxu0
        %v1389 = vunpack.c.l.bf16 %v746
        %v1390 = vunpack.c.h.bf16 %v746
        %v1391 = vunpack.c.l.bf16 %v748
        %v1392 = vunpack.c.h.bf16 %v748
        %v1393 = vmul.f32 %v1375, %v1389
        %v1394 = vmul.f32 %v1378, %v1390
        %v1395 = vmul.f32 %v1383, %v1391
        %v1396 = vmul.f32 %v1386, %v1392
        %v1397 = vpack.c.bf16 %v1335, %v1335
        %v1399 = vsel %vm1120, %v1397, 0
        %1401 = vmatprep.subr.bf16.mxu0 0
        %1402 = vmatpush1.bf16.msra.mxu0 %v1399
        %1403 = vmatprep.subr.bf16.mxu0 0
        %1404 = vmatpush1.bf16.msra.mxu0 0
        %1405 = vmatprep.subr.bf16.mxu0 0
        %1406 = vmatpush1.bf16.msra.mxu0 0
        %1407 = vmatprep.subr.bf16.mxu0 0
        %1408 = vmatpush1.bf16.msra.mxu0 0
        %1409 = vmatprep.subr.bf16.mxu0 0
        %1410 = vmatpush1.bf16.msra.mxu0 0
        %1411 = vmatprep.subr.bf16.mxu0 0
        %1412 = vmatpush1.bf16.msra.mxu0 0
        %1413 = vmatprep.subr.bf16.mxu0 0
        %1414 = vmatpush1.bf16.msra.mxu0 0
        %1415 = vmatprep.subr.bf16.mxu0 0
        %1416 = vmatpush1.bf16.msra.mxu0 0
        %1417 = vmatprep.subr.bf16.mxu0 0
        %1418 = vmatpush1.bf16.msra.mxu0 0
        %1419 = vmatprep.subr.bf16.mxu0 0
        %1420 = vmatpush1.bf16.msra.mxu0 0
        %1421 = vmatprep.subr.bf16.mxu0 0
        %1422 = vmatpush1.bf16.msra.mxu0 0
        %1423 = vmatprep.subr.bf16.mxu0 0
        %1424 = vmatpush1.bf16.msra.mxu0 0
        %1425 = vmatprep.subr.bf16.mxu0 0
        %1426 = vmatpush1.bf16.msra.mxu0 0
        %1427 = vmatprep.subr.bf16.mxu0 0
        %1428 = vmatpush1.bf16.msra.mxu0 0
        %1429 = vmatprep.subr.bf16.mxu0 0
        %1430 = vmatpush1.bf16.msra.mxu0 0
        %1431 = vmatprep.subr.bf16.mxu0 0
        %1432 = vmatpush1.bf16.msra.mxu0 0
        %1433 = vmatprep.mubr.bf16.mxu0 0
        %1434 = vmatmul.mubr.bf16.gmra.mrb[0].mxu0 %v1115
        %v1435 = vpop.f32.mrb[0].mxu0
        %v1436 = vadd.f32 0.0, %v1435
        %v1437 = vpop.f32.mrb[0].mxu0
        %v1438 = vpop.f32.mrb[0].mxu0
        %v1439 = vadd.f32 0.0, %v1438
        %v1440 = vpop.f32.mrb[0].mxu0
        %1441 = vmatprep.mubr.bf16.mxu0 0
        %1442 = vmatmul.mubr.bf16.gmra.mrb[0].mxu0 %v1118
        %v1443 = vpop.f32.mrb[0].mxu0
        %v1444 = vadd.f32 0.0, %v1443
        %v1445 = vpop.f32.mrb[0].mxu0
        %v1446 = vpop.f32.mrb[0].mxu0
        %v1447 = vadd.f32 0.0, %v1446
        %v1448 = vpop.f32.mrb[0].mxu0
        %1449 = vdwg.mxu0
        %v1450 = vunpack.c.l.bf16 %v747
        %v1451 = vunpack.c.h.bf16 %v747
        %v1452 = vunpack.c.l.bf16 %v749
        %v1453 = vunpack.c.h.bf16 %v749
        %v1454 = vmul.f32 %v1436, %v1450
        %v1455 = vmul.f32 %v1439, %v1451
        %v1456 = vmul.f32 %v1444, %v1452
        %v1457 = vmul.f32 %v1447, %v1453
        %v1458 = vadd.f32 %v1393, %v1454
        %v1459 = vadd.f32 %v1394, %v1455
        %v1460 = vadd.f32 %v1395, %v1456
        %v1461 = vadd.f32 %v1396, %v1457
        %v1462 = vpack.c.bf16 %v1243, %v1242
        %v1463 = vpack.c.bf16 %v1245, %v1244
        %v1464 = vpack.c.bf16 %v1459, %v1458
        %v1465 = vpack.c.bf16 %v1461, %v1460
        %1467 = vset.pattern.permute.xlu0 0
        %1468 = vperm.xlu0 %1467, %v1004
        %v1469 = vpop.permute.xlu0 %1468
        %1472 = vset.pattern.permute.xlu0 0
        %1473 = vperm.xlu0 %1472, %v1005
        %v1474 = vpop.permute.xlu0 %1473
        %1477 = vset.pattern.permute.xlu0 0
        %1478 = vperm.xlu0 %1477, %v1006
        %v1479 = vpop.permute.xlu0 %1478
        %1482 = vset.pattern.permute.xlu0 0
        %1483 = vperm.xlu0 %1482, %v1007
        %v1484 = vpop.permute.xlu0 %1483
        %v1490 = vunpack.c.l.b16 %v1000
        %v1491 = vunpack.c.l.b16 %v1001
        %v1492 = vunpack.c.l.b16 %v1002
        %v1493 = vunpack.c.l.b16 %v1003
        %v1494 = vpack.c.b16 %v1491, %v1490
        %v1495 = vpack.c.b16 %v1493, %v1492
        %vm1496 = vcmask 523264
        %v1498 = vsel %vm1496, %v1494, 0
        %v1501 = vsel %vm1496, %v1495, 0
        %1503 = vmatprep.subr.bf16.mxu0 0
        %1504 = vmatpush1.bf16.msra.mxu0 %v1462
        %1505 = vmatprep.subr.bf16.mxu0 0
        %1506 = vmatpush1.bf16.msra.mxu0 %v1463
        %1507 = vmatprep.subr.bf16.mxu0 0
        %1508 = vmatpush1.bf16.msra.mxu0 %v1464
        %1509 = vmatprep.subr.bf16.mxu0 0
        %1510 = vmatpush1.bf16.msra.mxu0 %v1465
        %1511 = vmatprep.subr.bf16.mxu0 0
        %1512 = vmatpush1.bf16.msra.mxu0 0
        %1513 = vmatprep.subr.bf16.mxu0 0
        %1514 = vmatpush1.bf16.msra.mxu0 0
        %1515 = vmatprep.subr.bf16.mxu0 0
        %1516 = vmatpush1.bf16.msra.mxu0 0
        %1517 = vmatprep.subr.bf16.mxu0 0
        %1518 = vmatpush1.bf16.msra.mxu0 0
        %1519 = vmatprep.subr.bf16.mxu0 0
        %1520 = vmatpush1.bf16.msra.mxu0 0
        %1521 = vmatprep.subr.bf16.mxu0 0
        %1522 = vmatpush1.bf16.msra.mxu0 0
        %1523 = vmatprep.subr.bf16.mxu0 0
        %1524 = vmatpush1.bf16.msra.mxu0 0
        %1525 = vmatprep.subr.bf16.mxu0 0
        %1526 = vmatpush1.bf16.msra.mxu0 0
        %1527 = vmatprep.subr.bf16.mxu0 0
        %1528 = vmatpush1.bf16.msra.mxu0 0
        %1529 = vmatprep.subr.bf16.mxu0 0
        %1530 = vmatpush1.bf16.msra.mxu0 0
        %1531 = vmatprep.subr.bf16.mxu0 0
        %1532 = vmatpush1.bf16.msra.mxu0 0
        %1533 = vmatprep.subr.bf16.mxu0 0
        %1534 = vmatpush1.bf16.msra.mxu0 0
        %1535 = vmatprep.mubr.bf16.mxu0 0
        %1536 = vmatmul.mubr.bf16.gmra.mrb[0].mxu0 %v1498
        %v1537 = vpop.f32.mrb[0].mxu0
        %v1538 = vadd.f32 %v1469, %v1537
        %v1539 = vpop.f32.mrb[0].mxu0
        %v1540 = vpop.f32.mrb[0].mxu0
        %v1541 = vadd.f32 %v1474, %v1540
        %v1542 = vpop.f32.mrb[0].mxu0
        %1543 = vmatprep.mubr.bf16.mxu0 0
        %1544 = vmatmul.mubr.bf16.gmra.mrb[0].mxu0 %v1501
        %v1545 = vpop.f32.mrb[0].mxu0
        %v1546 = vadd.f32 %v1479, %v1545
        %v1547 = vpop.f32.mrb[0].mxu0
        %v1548 = vpop.f32.mrb[0].mxu0
        %v1549 = vadd.f32 %v1484, %v1548
        %v1550 = vpop.f32.mrb[0].mxu0
        %1551 = vdwg.mxu0
        %v1552 = vpack.c.bf16 %v1541, %v1538
        %v1553 = vpack.c.bf16 %v1549, %v1546
        %v1556 = vunpack.c.l.b16 %v1552
        %v1557 = vunpack.c.h.b16 %v1552
        %v1558 = vunpack.c.l.b16 %v1553
        %v1559 = vunpack.c.h.b16 %v1553
        %v1560 = vpack.c.b16 %v1556, %v1556
        %v1561 = vpack.c.b16 %v1557, %v1557
        %v1562 = vpack.c.b16 %v1558, %v1558
        %v1563 = vpack.c.b16 %v1559, %v1559
        %1568 = vst [vmem:[%s490] sm:$0xf] %v1560
        %1569 = vst [vmem:[%s490 + $0x4] sm:$0xf] %v1561
        %1570 = vst [vmem:[%s490 + $0x8] sm:$0xf] %v1562
        %1571 = vst [vmem:[%s490 + $0xc] sm:$0xf] %v1563
        %v1572 = vadd.f32 %v1538, %v1541
        %v1573 = vadd.f32 %v1572, %v1546
        %v1574 = vadd.f32 %v1573, %v1549
        %v1575 = vrot.slane %v1574, 4
        %v1576 = vadd.f32 %v1574, %v1575
        %v1577 = vrot.slane %v1576, 2
        %v1578 = vadd.f32 %v1576, %v1577
        %v1579 = vrot.slane %v1578, 1
        %v1580 = vadd.f32 %v1578, %v1579
        %1581 = vst [vmem:[%s497] sm:$0x1] %v1580
        %v1582 = vmul.f32 %v1538, %v1538
        %v1583 = vmul.f32 %v1541, %v1541
        %v1584 = vmul.f32 %v1546, %v1546
        %v1585 = vmul.f32 %v1549, %v1549
        %v1586 = vadd.f32 %v1582, %v1583
        %v1587 = vadd.f32 %v1586, %v1584
        %v1588 = vadd.f32 %v1587, %v1585
        %v1589 = vrot.slane %v1588, 4
        %v1590 = vadd.f32 %v1588, %v1589
        %v1591 = vrot.slane %v1590, 2
        %v1592 = vadd.f32 %v1590, %v1591
        %v1593 = vrot.slane %v1592, 1
        %v1594 = vadd.f32 %v1592, %v1593
        %1595 = vst [vmem:[%s497 + $0x1] sm:$0x1] %v1594
        %v1596 = vmul.bf16 %v739, %v987
        %v1597 = vmul.bf16 %v741, %v989
        %1598 = vmatprep.subr.bf16.mxu0 0
        %1599 = vmatpush1.bf16.msra.mxu0 %v1596
        %1600 = vmatprep.subr.bf16.mxu0 0
        %1601 = vmatpush1.bf16.msra.mxu0 %v1597
        %1602 = vmatprep.subr.bf16.mxu0 0
        %1603 = vmatpush1.bf16.msra.mxu0 0
        %1604 = vmatprep.subr.bf16.mxu0 0
        %1605 = vmatpush1.bf16.msra.mxu0 0
        %1606 = vmatprep.subr.bf16.mxu0 0
        %1607 = vmatpush1.bf16.msra.mxu0 0
        %1608 = vmatprep.subr.bf16.mxu0 0
        %1609 = vmatpush1.bf16.msra.mxu0 0
        %1610 = vmatprep.subr.bf16.mxu0 0
        %1611 = vmatpush1.bf16.msra.mxu0 0
        %1612 = vmatprep.subr.bf16.mxu0 0
        %1613 = vmatpush1.bf16.msra.mxu0 0
        %1614 = vmatprep.subr.bf16.mxu0 0
        %1615 = vmatpush1.bf16.msra.mxu0 0
        %1616 = vmatprep.subr.bf16.mxu0 0
        %1617 = vmatpush1.bf16.msra.mxu0 0
        %1618 = vmatprep.subr.bf16.mxu0 0
        %1619 = vmatpush1.bf16.msra.mxu0 0
        %1620 = vmatprep.subr.bf16.mxu0 0
        %1621 = vmatpush1.bf16.msra.mxu0 0
        %1622 = vmatprep.subr.bf16.mxu0 0
        %1623 = vmatpush1.bf16.msra.mxu0 0
        %1624 = vmatprep.subr.bf16.mxu0 0
        %1625 = vmatpush1.bf16.msra.mxu0 0
        %1626 = vmatprep.subr.bf16.mxu0 0
        %1627 = vmatpush1.bf16.msra.mxu0 0
        %1628 = vmatprep.subr.bf16.mxu0 0
        %1629 = vmatpush1.bf16.msra.mxu0 0
        %1630 = vmatprep.mubr.bf16.mxu0 0
        %1631 = vmatmul.mubr.bf16.gmra.mrb[0].mxu0 %v1012
        %v1632 = vpop.f32.mrb[0].mxu0
        %v1633 = vadd.f32 0.0, %v1632
        %v1634 = vpop.f32.mrb[0].mxu0
        %v1635 = vpop.f32.mrb[0].mxu0
        %v1636 = vpop.f32.mrb[0].mxu0
        %1637 = vdwg.mxu0
        %v1638 = vmul.bf16 %v739, %v988
        %v1639 = vmul.bf16 %v741, %v990
        %1640 = vmatprep.subr.bf16.mxu0 0
        %1641 = vmatpush1.bf16.msra.mxu0 %v1638
        %1642 = vmatprep.subr.bf16.mxu0 0
        %1643 = vmatpush1.bf16.msra.mxu0 %v1639
        %1644 = vmatprep.subr.bf16.mxu0 0
        %1645 = vmatpush1.bf16.msra.mxu0 0
        %1646 = vmatprep.subr.bf16.mxu0 0
        %1647 = vmatpush1.bf16.msra.mxu0 0
        %1648 = vmatprep.subr.bf16.mxu0 0
        %1649 = vmatpush1.bf16.msra.mxu0 0
        %1650 = vmatprep.subr.bf16.mxu0 0
        %1651 = vmatpush1.bf16.msra.mxu0 0
        %1652 = vmatprep.subr.bf16.mxu0 0
        %1653 = vmatpush1.bf16.msra.mxu0 0
        %1654 = vmatprep.subr.bf16.mxu0 0
        %1655 = vmatpush1.bf16.msra.mxu0 0
        %1656 = vmatprep.subr.bf16.mxu0 0
        %1657 = vmatpush1.bf16.msra.mxu0 0
        %1658 = vmatprep.subr.bf16.mxu0 0
        %1659 = vmatpush1.bf16.msra.mxu0 0
        %1660 = vmatprep.subr.bf16.mxu0 0
        %1661 = vmatpush1.bf16.msra.mxu0 0
        %1662 = vmatprep.subr.bf16.mxu0 0
        %1663 = vmatpush1.bf16.msra.mxu0 0
        %1664 = vmatprep.subr.bf16.mxu0 0
        %1665 = vmatpush1.bf16.msra.mxu0 0
        %1666 = vmatprep.subr.bf16.mxu0 0
        %1667 = vmatpush1.bf16.msra.mxu0 0
        %1668 = vmatprep.subr.bf16.mxu0 0
        %1669 = vmatpush1.bf16.msra.mxu0 0
        %1670 = vmatprep.subr.bf16.mxu0 0
        %1671 = vmatpush1.bf16.msra.mxu0 0
        %1672 = vmatprep.mubr.bf16.mxu0 0
        %1673 = vmatmul.mubr.bf16.gmra.mrb[0].mxu0 %v1012
        %v1674 = vpop.f32.mrb[0].mxu0
        %v1675 = vadd.f32 0.0, %v1674
        %v1676 = vpop.f32.mrb[0].mxu0
        %v1677 = vpop.f32.mrb[0].mxu0
        %v1678 = vpop.f32.mrb[0].mxu0
        %1679 = vdwg.mxu0
        %v1680 = vsub.f32 %v1675, %v1633
        %v1681 = vmul.f32 %v1680, 1.442695
        %v1682 = vpow.pop %v1681
        %v1683 = vadd.f32 %v1682, 1.0
        %v1684 = vrcp.pop %v1683
        %v1685 = vsub.f32 1.0, %v1684
        %v1686 = vpack.c.bf16 %v1684, %v1684
        %v1688 = vsel %vm1120, %v1686, 0
        %1690 = vmatprep.subr.bf16.mxu0 0
        %1691 = vmatpush1.bf16.msra.mxu0 %v1688
        %1692 = vmatprep.subr.bf16.mxu0 0
        %1693 = vmatpush1.bf16.msra.mxu0 0
        %1694 = vmatprep.subr.bf16.mxu0 0
        %1695 = vmatpush1.bf16.msra.mxu0 0
        %1696 = vmatprep.subr.bf16.mxu0 0
        %1697 = vmatpush1.bf16.msra.mxu0 0
        %1698 = vmatprep.subr.bf16.mxu0 0
        %1699 = vmatpush1.bf16.msra.mxu0 0
        %1700 = vmatprep.subr.bf16.mxu0 0
        %1701 = vmatpush1.bf16.msra.mxu0 0
        %1702 = vmatprep.subr.bf16.mxu0 0
        %1703 = vmatpush1.bf16.msra.mxu0 0
        %1704 = vmatprep.subr.bf16.mxu0 0
        %1705 = vmatpush1.bf16.msra.mxu0 0
        %1706 = vmatprep.subr.bf16.mxu0 0
        %1707 = vmatpush1.bf16.msra.mxu0 0
        %1708 = vmatprep.subr.bf16.mxu0 0
        %1709 = vmatpush1.bf16.msra.mxu0 0
        %1710 = vmatprep.subr.bf16.mxu0 0
        %1711 = vmatpush1.bf16.msra.mxu0 0
        %1712 = vmatprep.subr.bf16.mxu0 0
        %1713 = vmatpush1.bf16.msra.mxu0 0
        %1714 = vmatprep.subr.bf16.mxu0 0
        %1715 = vmatpush1.bf16.msra.mxu0 0
        %1716 = vmatprep.subr.bf16.mxu0 0
        %1717 = vmatpush1.bf16.msra.mxu0 0
        %1718 = vmatprep.subr.bf16.mxu0 0
        %1719 = vmatpush1.bf16.msra.mxu0 0
        %1720 = vmatprep.subr.bf16.mxu0 0
        %1721 = vmatpush1.bf16.msra.mxu0 0
        %1722 = vmatprep.mubr.bf16.mxu0 0
        %1723 = vmatmul.mubr.bf16.gmra.mrb[0].mxu0 %v1115
        %v1724 = vpop.f32.mrb[0].mxu0
        %v1725 = vadd.f32 0.0, %v1724
        %v1726 = vpop.f32.mrb[0].mxu0
        %v1727 = vpop.f32.mrb[0].mxu0
        %v1728 = vadd.f32 0.0, %v1727
        %v1729 = vpop.f32.mrb[0].mxu0
        %1730 = vmatprep.mubr.bf16.mxu0 0
        %1731 = vmatmul.mubr.bf16.gmra.mrb[0].mxu0 %v1118
        %v1732 = vpop.f32.mrb[0].mxu0
        %v1733 = vadd.f32 0.0, %v1732
        %v1734 = vpop.f32.mrb[0].mxu0
        %v1735 = vpop.f32.mrb[0].mxu0
        %v1736 = vadd.f32 0.0, %v1735
        %v1737 = vpop.f32.mrb[0].mxu0
        %1738 = vdwg.mxu0
        %v1739 = vmul.f32 %v1725, %v1173
        %v1740 = vmul.f32 %v1728, %v1174
        %v1741 = vmul.f32 %v1733, %v1175
        %v1742 = vmul.f32 %v1736, %v1176
        %v1743 = vpack.c.bf16 %v1685, %v1685
        %v1745 = vsel %vm1120, %v1743, 0
        %1747 = vmatprep.subr.bf16.mxu0 0
        %1748 = vmatpush1.bf16.msra.mxu0 %v1745
        %1749 = vmatprep.subr.bf16.mxu0 0
        %1750 = vmatpush1.bf16.msra.mxu0 0
        %1751 = vmatprep.subr.bf16.mxu0 0
        %1752 = vmatpush1.bf16.msra.mxu0 0
        %1753 = vmatprep.subr.bf16.mxu0 0
        %1754 = vmatpush1.bf16.msra.mxu0 0
        %1755 = vmatprep.subr.bf16.mxu0 0
        %1756 = vmatpush1.bf16.msra.mxu0 0
        %1757 = vmatprep.subr.bf16.mxu0 0
        %1758 = vmatpush1.bf16.msra.mxu0 0
        %1759 = vmatprep.subr.bf16.mxu0 0
        %1760 = vmatpush1.bf16.msra.mxu0 0
        %1761 = vmatprep.subr.bf16.mxu0 0
        %1762 = vmatpush1.bf16.msra.mxu0 0
        %1763 = vmatprep.subr.bf16.mxu0 0
        %1764 = vmatpush1.bf16.msra.mxu0 0
        %1765 = vmatprep.subr.bf16.mxu0 0
        %1766 = vmatpush1.bf16.msra.mxu0 0
        %1767 = vmatprep.subr.bf16.mxu0 0
        %1768 = vmatpush1.bf16.msra.mxu0 0
        %1769 = vmatprep.subr.bf16.mxu0 0
        %1770 = vmatpush1.bf16.msra.mxu0 0
        %1771 = vmatprep.subr.bf16.mxu0 0
        %1772 = vmatpush1.bf16.msra.mxu0 0
        %1773 = vmatprep.subr.bf16.mxu0 0
        %1774 = vmatpush1.bf16.msra.mxu0 0
        %1775 = vmatprep.subr.bf16.mxu0 0
        %1776 = vmatpush1.bf16.msra.mxu0 0
        %1777 = vmatprep.subr.bf16.mxu0 0
        %1778 = vmatpush1.bf16.msra.mxu0 0
        %1779 = vmatprep.mubr.bf16.mxu0 0
        %1780 = vmatmul.mubr.bf16.gmra.mrb[0].mxu0 %v1115
        %v1781 = vpop.f32.mrb[0].mxu0
        %v1782 = vadd.f32 0.0, %v1781
        %v1783 = vpop.f32.mrb[0].mxu0
        %v1784 = vpop.f32.mrb[0].mxu0
        %v1785 = vadd.f32 0.0, %v1784
        %v1786 = vpop.f32.mrb[0].mxu0
        %1787 = vmatprep.mubr.bf16.mxu0 0
        %1788 = vmatmul.mubr.bf16.gmra.mrb[0].mxu0 %v1118
        %v1789 = vpop.f32.mrb[0].mxu0
        %v1790 = vadd.f32 0.0, %v1789
        %v1791 = vpop.f32.mrb[0].mxu0
        %v1792 = vpop.f32.mrb[0].mxu0
        %v1793 = vadd.f32 0.0, %v1792
        %v1794 = vpop.f32.mrb[0].mxu0
        %1795 = vdwg.mxu0
        %v1796 = vmul.f32 %v1782, %v1234
        %v1797 = vmul.f32 %v1785, %v1235
        %v1798 = vmul.f32 %v1790, %v1236
        %v1799 = vmul.f32 %v1793, %v1237
        %v1800 = vadd.f32 %v1739, %v1796
        %v1801 = vadd.f32 %v1740, %v1797
        %v1802 = vadd.f32 %v1741, %v1798
        %v1803 = vadd.f32 %v1742, %v1799
        %v1804 = vmul.bf16 %v984, %v742
        %v1805 = vmul.bf16 %v986, %v744
        %1806 = vmatprep.subr.bf16.mxu0 0
        %1807 = vmatpush1.bf16.msra.mxu0 %v1804
        %1808 = vmatprep.subr.bf16.mxu0 0
        %1809 = vmatpush1.bf16.msra.mxu0 %v1805
        %1810 = vmatprep.subr.bf16.mxu0 0
        %1811 = vmatpush1.bf16.msra.mxu0 0
        %1812 = vmatprep.subr.bf16.mxu0 0
        %1813 = vmatpush1.bf16.msra.mxu0 0
        %1814 = vmatprep.subr.bf16.mxu0 0
        %1815 = vmatpush1.bf16.msra.mxu0 0
        %1816 = vmatprep.subr.bf16.mxu0 0
        %1817 = vmatpush1.bf16.msra.mxu0 0
        %1818 = vmatprep.subr.bf16.mxu0 0
        %1819 = vmatpush1.bf16.msra.mxu0 0
        %1820 = vmatprep.subr.bf16.mxu0 0
        %1821 = vmatpush1.bf16.msra.mxu0 0
        %1822 = vmatprep.subr.bf16.mxu0 0
        %1823 = vmatpush1.bf16.msra.mxu0 0
        %1824 = vmatprep.subr.bf16.mxu0 0
        %1825 = vmatpush1.bf16.msra.mxu0 0
        %1826 = vmatprep.subr.bf16.mxu0 0
        %1827 = vmatpush1.bf16.msra.mxu0 0
        %1828 = vmatprep.subr.bf16.mxu0 0
        %1829 = vmatpush1.bf16.msra.mxu0 0
        %1830 = vmatprep.subr.bf16.mxu0 0
        %1831 = vmatpush1.bf16.msra.mxu0 0
        %1832 = vmatprep.subr.bf16.mxu0 0
        %1833 = vmatpush1.bf16.msra.mxu0 0
        %1834 = vmatprep.subr.bf16.mxu0 0
        %1835 = vmatpush1.bf16.msra.mxu0 0
        %1836 = vmatprep.subr.bf16.mxu0 0
        %1837 = vmatpush1.bf16.msra.mxu0 0
        %1838 = vmatprep.mubr.bf16.mxu0 0
        %1839 = vmatmul.mubr.bf16.gmra.mrb[0].mxu0 %v1012
        %v1840 = vpop.f32.mrb[0].mxu0
        %v1841 = vadd.f32 0.0, %v1840
        %v1842 = vpop.f32.mrb[0].mxu0
        %v1843 = vpop.f32.mrb[0].mxu0
        %v1844 = vpop.f32.mrb[0].mxu0
        %1845 = vdwg.mxu0
        %v1846 = vmul.bf16 %v984, %v743
        %v1847 = vmul.bf16 %v986, %v745
        %1848 = vmatprep.subr.bf16.mxu0 0
        %1849 = vmatpush1.bf16.msra.mxu0 %v1846
        %1850 = vmatprep.subr.bf16.mxu0 0
        %1851 = vmatpush1.bf16.msra.mxu0 %v1847
        %1852 = vmatprep.subr.bf16.mxu0 0
        %1853 = vmatpush1.bf16.msra.mxu0 0
        %1854 = vmatprep.subr.bf16.mxu0 0
        %1855 = vmatpush1.bf16.msra.mxu0 0
        %1856 = vmatprep.subr.bf16.mxu0 0
        %1857 = vmatpush1.bf16.msra.mxu0 0
        %1858 = vmatprep.subr.bf16.mxu0 0
        %1859 = vmatpush1.bf16.msra.mxu0 0
        %1860 = vmatprep.subr.bf16.mxu0 0
        %1861 = vmatpush1.bf16.msra.mxu0 0
        %1862 = vmatprep.subr.bf16.mxu0 0
        %1863 = vmatpush1.bf16.msra.mxu0 0
        %1864 = vmatprep.subr.bf16.mxu0 0
        %1865 = vmatpush1.bf16.msra.mxu0 0
        %1866 = vmatprep.subr.bf16.mxu0 0
        %1867 = vmatpush1.bf16.msra.mxu0 0
        %1868 = vmatprep.subr.bf16.mxu0 0
        %1869 = vmatpush1.bf16.msra.mxu0 0
        %1870 = vmatprep.subr.bf16.mxu0 0
        %1871 = vmatpush1.bf16.msra.mxu0 0
        %1872 = vmatprep.subr.bf16.mxu0 0
        %1873 = vmatpush1.bf16.msra.mxu0 0
        %1874 = vmatprep.subr.bf16.mxu0 0
        %1875 = vmatpush1.bf16.msra.mxu0 0
        %1876 = vmatprep.subr.bf16.mxu0 0
        %1877 = vmatpush1.bf16.msra.mxu0 0
        %1878 = vmatprep.subr.bf16.mxu0 0
        %1879 = vmatpush1.bf16.msra.mxu0 0
        %1880 = vmatprep.mubr.bf16.mxu0 0
        %1881 = vmatmul.mubr.bf16.gmra.mrb[0].mxu0 %v1012
        %v1882 = vpop.f32.mrb[0].mxu0
        %v1883 = vadd.f32 0.0, %v1882
        %v1884 = vpop.f32.mrb[0].mxu0
        %v1885 = vpop.f32.mrb[0].mxu0
        %v1886 = vpop.f32.mrb[0].mxu0
        %1887 = vdwg.mxu0
        %v1888 = vsub.f32 %v1883, %v1841
        %v1889 = vmul.f32 %v1888, 1.442695
        %v1890 = vpow.pop %v1889
        %v1891 = vadd.f32 %v1890, 1.0
        %v1892 = vrcp.pop %v1891
        %v1893 = vsub.f32 1.0, %v1892
        %v1894 = vpack.c.bf16 %v1892, %v1892
        %v1896 = vsel %vm1120, %v1894, 0
        %1898 = vmatprep.subr.bf16.mxu0 0
        %1899 = vmatpush1.bf16.msra.mxu0 %v1896
        %1900 = vmatprep.subr.bf16.mxu0 0
        %1901 = vmatpush1.bf16.msra.mxu0 0
        %1902 = vmatprep.subr.bf16.mxu0 0
        %1903 = vmatpush1.bf16.msra.mxu0 0
        %1904 = vmatprep.subr.bf16.mxu0 0
        %1905 = vmatpush1.bf16.msra.mxu0 0
        %1906 = vmatprep.subr.bf16.mxu0 0
        %1907 = vmatpush1.bf16.msra.mxu0 0
        %1908 = vmatprep.subr.bf16.mxu0 0
        %1909 = vmatpush1.bf16.msra.mxu0 0
        %1910 = vmatprep.subr.bf16.mxu0 0
        %1911 = vmatpush1.bf16.msra.mxu0 0
        %1912 = vmatprep.subr.bf16.mxu0 0
        %1913 = vmatpush1.bf16.msra.mxu0 0
        %1914 = vmatprep.subr.bf16.mxu0 0
        %1915 = vmatpush1.bf16.msra.mxu0 0
        %1916 = vmatprep.subr.bf16.mxu0 0
        %1917 = vmatpush1.bf16.msra.mxu0 0
        %1918 = vmatprep.subr.bf16.mxu0 0
        %1919 = vmatpush1.bf16.msra.mxu0 0
        %1920 = vmatprep.subr.bf16.mxu0 0
        %1921 = vmatpush1.bf16.msra.mxu0 0
        %1922 = vmatprep.subr.bf16.mxu0 0
        %1923 = vmatpush1.bf16.msra.mxu0 0
        %1924 = vmatprep.subr.bf16.mxu0 0
        %1925 = vmatpush1.bf16.msra.mxu0 0
        %1926 = vmatprep.subr.bf16.mxu0 0
        %1927 = vmatpush1.bf16.msra.mxu0 0
        %1928 = vmatprep.subr.bf16.mxu0 0
        %1929 = vmatpush1.bf16.msra.mxu0 0
        %1930 = vmatprep.mubr.bf16.mxu0 0
        %1931 = vmatmul.mubr.bf16.gmra.mrb[0].mxu0 %v1115
        %v1932 = vpop.f32.mrb[0].mxu0
        %v1933 = vadd.f32 0.0, %v1932
        %v1934 = vpop.f32.mrb[0].mxu0
        %v1935 = vpop.f32.mrb[0].mxu0
        %v1936 = vadd.f32 0.0, %v1935
        %v1937 = vpop.f32.mrb[0].mxu0
        %1938 = vmatprep.mubr.bf16.mxu0 0
        %1939 = vmatmul.mubr.bf16.gmra.mrb[0].mxu0 %v1118
        %v1940 = vpop.f32.mrb[0].mxu0
        %v1941 = vadd.f32 0.0, %v1940
        %v1942 = vpop.f32.mrb[0].mxu0
        %v1943 = vpop.f32.mrb[0].mxu0
        %v1944 = vadd.f32 0.0, %v1943
        %v1945 = vpop.f32.mrb[0].mxu0
        %1946 = vdwg.mxu0
        %v1947 = vmul.f32 %v1933, %v1389
        %v1948 = vmul.f32 %v1936, %v1390
        %v1949 = vmul.f32 %v1941, %v1391
        %v1950 = vmul.f32 %v1944, %v1392
        %v1951 = vpack.c.bf16 %v1893, %v1893
        %v1953 = vsel %vm1120, %v1951, 0
        %1955 = vmatprep.subr.bf16.mxu0 0
        %1956 = vmatpush1.bf16.msra.mxu0 %v1953
        %1957 = vmatprep.subr.bf16.mxu0 0
        %1958 = vmatpush1.bf16.msra.mxu0 0
        %1959 = vmatprep.subr.bf16.mxu0 0
        %1960 = vmatpush1.bf16.msra.mxu0 0
        %1961 = vmatprep.subr.bf16.mxu0 0
        %1962 = vmatpush1.bf16.msra.mxu0 0
        %1963 = vmatprep.subr.bf16.mxu0 0
        %1964 = vmatpush1.bf16.msra.mxu0 0
        %1965 = vmatprep.subr.bf16.mxu0 0
        %1966 = vmatpush1.bf16.msra.mxu0 0
        %1967 = vmatprep.subr.bf16.mxu0 0
        %1968 = vmatpush1.bf16.msra.mxu0 0
        %1969 = vmatprep.subr.bf16.mxu0 0
        %1970 = vmatpush1.bf16.msra.mxu0 0
        %1971 = vmatprep.subr.bf16.mxu0 0
        %1972 = vmatpush1.bf16.msra.mxu0 0
        %1973 = vmatprep.subr.bf16.mxu0 0
        %1974 = vmatpush1.bf16.msra.mxu0 0
        %1975 = vmatprep.subr.bf16.mxu0 0
        %1976 = vmatpush1.bf16.msra.mxu0 0
        %1977 = vmatprep.subr.bf16.mxu0 0
        %1978 = vmatpush1.bf16.msra.mxu0 0
        %1979 = vmatprep.subr.bf16.mxu0 0
        %1980 = vmatpush1.bf16.msra.mxu0 0
        %1981 = vmatprep.subr.bf16.mxu0 0
        %1982 = vmatpush1.bf16.msra.mxu0 0
        %1983 = vmatprep.subr.bf16.mxu0 0
        %1984 = vmatpush1.bf16.msra.mxu0 0
        %1985 = vmatprep.subr.bf16.mxu0 0
        %1986 = vmatpush1.bf16.msra.mxu0 0
        %1987 = vmatprep.mubr.bf16.mxu0 0
        %1988 = vmatmul.mubr.bf16.gmra.mrb[0].mxu0 %v1115
        %v1989 = vpop.f32.mrb[0].mxu0
        %v1990 = vadd.f32 0.0, %v1989
        %v1991 = vpop.f32.mrb[0].mxu0
        %v1992 = vpop.f32.mrb[0].mxu0
        %v1993 = vadd.f32 0.0, %v1992
        %v1994 = vpop.f32.mrb[0].mxu0
        %1995 = vmatprep.mubr.bf16.mxu0 0
        %1996 = vmatmul.mubr.bf16.gmra.mrb[0].mxu0 %v1118
        %v1997 = vpop.f32.mrb[0].mxu0
        %v1998 = vadd.f32 0.0, %v1997
        %v1999 = vpop.f32.mrb[0].mxu0
        %v2000 = vpop.f32.mrb[0].mxu0
        %v2001 = vadd.f32 0.0, %v2000
        %v2002 = vpop.f32.mrb[0].mxu0
        %2003 = vdwg.mxu0
        %v2004 = vmul.f32 %v1990, %v1450
        %v2005 = vmul.f32 %v1993, %v1451
        %v2006 = vmul.f32 %v1998, %v1452
        %v2007 = vmul.f32 %v2001, %v1453
        %v2008 = vadd.f32 %v1947, %v2004
        %v2009 = vadd.f32 %v1948, %v2005
        %v2010 = vadd.f32 %v1949, %v2006
        %v2011 = vadd.f32 %v1950, %v2007
        %v2012 = vpack.c.bf16 %v1801, %v1800
        %v2013 = vpack.c.bf16 %v1803, %v1802
        %v2014 = vpack.c.bf16 %v2009, %v2008
        %v2015 = vpack.c.bf16 %v2011, %v2010
        %2016 = vmatprep.subr.bf16.mxu0 0
        %2017 = vmatpush1.bf16.msra.mxu0 %v2012
        %2018 = vmatprep.subr.bf16.mxu0 0
        %2019 = vmatpush1.bf16.msra.mxu0 %v2013
        %2020 = vmatprep.subr.bf16.mxu0 0
        %2021 = vmatpush1.bf16.msra.mxu0 %v2014
        %2022 = vmatprep.subr.bf16.mxu0 0
        %2023 = vmatpush1.bf16.msra.mxu0 %v2015
        %2024 = vmatprep.subr.bf16.mxu0 0
        %2025 = vmatpush1.bf16.msra.mxu0 0
        %2026 = vmatprep.subr.bf16.mxu0 0
        %2027 = vmatpush1.bf16.msra.mxu0 0
        %2028 = vmatprep.subr.bf16.mxu0 0
        %2029 = vmatpush1.bf16.msra.mxu0 0
        %2030 = vmatprep.subr.bf16.mxu0 0
        %2031 = vmatpush1.bf16.msra.mxu0 0
        %2032 = vmatprep.subr.bf16.mxu0 0
        %2033 = vmatpush1.bf16.msra.mxu0 0
        %2034 = vmatprep.subr.bf16.mxu0 0
        %2035 = vmatpush1.bf16.msra.mxu0 0
        %2036 = vmatprep.subr.bf16.mxu0 0
        %2037 = vmatpush1.bf16.msra.mxu0 0
        %2038 = vmatprep.subr.bf16.mxu0 0
        %2039 = vmatpush1.bf16.msra.mxu0 0
        %2040 = vmatprep.subr.bf16.mxu0 0
        %2041 = vmatpush1.bf16.msra.mxu0 0
        %2042 = vmatprep.subr.bf16.mxu0 0
        %2043 = vmatpush1.bf16.msra.mxu0 0
        %2044 = vmatprep.subr.bf16.mxu0 0
        %2045 = vmatpush1.bf16.msra.mxu0 0
        %2046 = vmatprep.subr.bf16.mxu0 0
        %2047 = vmatpush1.bf16.msra.mxu0 0
        %2048 = vmatprep.mubr.bf16.mxu0 0
        %2049 = vmatmul.mubr.bf16.gmra.mrb[0].mxu0 %v1498
        %v2050 = vpop.f32.mrb[0].mxu0
        %v2051 = vadd.f32 %v1469, %v2050
        %v2052 = vpop.f32.mrb[0].mxu0
        %v2053 = vpop.f32.mrb[0].mxu0
        %v2054 = vadd.f32 %v1474, %v2053
        %v2055 = vpop.f32.mrb[0].mxu0
        %2056 = vmatprep.mubr.bf16.mxu0 0
        %2057 = vmatmul.mubr.bf16.gmra.mrb[0].mxu0 %v1501
        %v2058 = vpop.f32.mrb[0].mxu0
        %v2059 = vadd.f32 %v1479, %v2058
        %v2060 = vpop.f32.mrb[0].mxu0
        %v2061 = vpop.f32.mrb[0].mxu0
        %v2062 = vadd.f32 %v1484, %v2061
        %v2063 = vpop.f32.mrb[0].mxu0
        %2064 = vdwg.mxu0
        %v2065 = vpack.c.bf16 %v2054, %v2051
        %v2066 = vpack.c.bf16 %v2062, %v2059
        %v2069 = vunpack.c.l.b16 %v2065
        %v2070 = vunpack.c.h.b16 %v2065
        %v2071 = vunpack.c.l.b16 %v2066
        %v2072 = vunpack.c.h.b16 %v2066
        %v2073 = vpack.c.b16 %v2069, %v2069
        %v2074 = vpack.c.b16 %v2070, %v2070
        %v2075 = vpack.c.b16 %v2071, %v2071
        %v2076 = vpack.c.b16 %v2072, %v2072
        %s2081 = scalar_lea.vmem %s490, 16 [#allocation4]
        %2082 = vst [vmem:[%s2081] sm:$0xf] %v2073
        %2083 = vst [vmem:[%s2081 + $0x4] sm:$0xf] %v2074
        %2084 = vst [vmem:[%s2081 + $0x8] sm:$0xf] %v2075
        %2085 = vst [vmem:[%s2081 + $0xc] sm:$0xf] %v2076
        %v2086 = vadd.f32 %v2051, %v2054
        %v2087 = vadd.f32 %v2086, %v2059
        %v2088 = vadd.f32 %v2087, %v2062
        %v2089 = vrot.slane %v2088, 4
        %v2090 = vadd.f32 %v2088, %v2089
        %v2091 = vrot.slane %v2090, 2
        %v2092 = vadd.f32 %v2090, %v2091
        %v2093 = vrot.slane %v2092, 1
        %v2094 = vadd.f32 %v2092, %v2093
        %2095 = vst [vmem:[%s497 + $0x2] sm:$0x1] %v2094
        %v2096 = vmul.f32 %v2051, %v2051
        %v2097 = vmul.f32 %v2054, %v2054
        %v2098 = vmul.f32 %v2059, %v2059
        %v2099 = vmul.f32 %v2062, %v2062
        %v2100 = vadd.f32 %v2096, %v2097
        %v2101 = vadd.f32 %v2100, %v2098
        %v2102 = vadd.f32 %v2101, %v2099
        %v2103 = vrot.slane %v2102, 4
        %v2104 = vadd.f32 %v2102, %v2103
        %v2105 = vrot.slane %v2104, 2
        %v2106 = vadd.f32 %v2104, %v2105
        %v2107 = vrot.slane %v2106, 1
        %v2108 = vadd.f32 %v2106, %v2107
        %2109 = vst [vmem:[%s497 + $0x3] sm:$0x1] %v2108
        %s2110 = sand.u32 %s257, 1
        %s2111 = scalar_lea.sflag [#allocation5], %s2110
        %s2112 = sand.u32 %s257, 1
        %s2113 = smul.addr %s2112, 32
        %s2114 = scalar_lea.vmem [#allocation4], %s2113
        %s2115 = sand.u32 %s283, 1
        %s2116 = scalar_lea.sflag [#allocation7], %s2115
        %s2117 = sand.u32 %s283, 1
        %s2118 = smul.addr %s2117, 4
        %s2119 = scalar_lea.vmem [#allocation6], %s2118
        // Predicated region
        $region136: #{tpu_custom_call.1} parent=126 // pred_check
          %p2120 = pneg %p267
        $region137: #{tpu_custom_call.1} parent=126 // pred_check_branch
          %2122 = sbr.rel (%p2120) target = $region139
        $region138: #{tpu_custom_call.1} parent=126 // pred_region
          %s2124 = ssub.s32 512, 512
          %2125 = vsyncadd %s2111, %s2124
          %s2126 = smul.addr %s29, 64
          %s2127 = scalar_lea.hbm %s10, %s2126
          %s2128 = sshll.u32 %s2114, 4
          %s2129 = int_to_ptr.vmem [resolvable:$true] %s2128
          %2134 = dma.vmem_to_hbm [thread:$0]  %s2129, 512, %s2127, %s2111, 64, 128, 4
        $region139: #{tpu_custom_call.1} parent=126 // pred_fallthru
          _
        // Predicated region
        $region140: #{tpu_custom_call.1} parent=126 // pred_check
          %p2135 = pneg %p293
        $region141: #{tpu_custom_call.1} parent=126 // pred_check_branch
          %2137 = sbr.rel (%p2135) target = $region143
        $region142: #{tpu_custom_call.1} parent=126 // pred_region
          %s2139 = ssub.s32 64, 64
          %2140 = vsyncadd %s2116, %s2139
          %s2141 = smul.addr %s29, 64
          %s2142 = scalar_lea.hbm %s11, %s2141
          %s2144 = sshll.u32 %s2119, 4
          %s2145 = int_to_ptr.vmem [resolvable:$true] %s2144
          %2147 = dma.vmem_to_hbm [thread:$0]  %s2145, 64, %s2142, %s2116
        $region143: #{tpu_custom_call.1} parent=126 // pred_fallthru
          _
      $region127: #{tpu_custom_call.1} parent=5 // pred_fallthru
        _
      %p2148 = scmp.le.s32.totalorder 2, %s24
      // Predicated region
      $region144: #{tpu_custom_call.1} parent=5 // pred_check
        %p2149 = pneg %p2148
      $region145: #{tpu_custom_call.1} parent=5 // pred_check_branch
        %2151 = sbr.rel (%p2149) target = $region147
      $region146: #{tpu_custom_call.1} parent=5 // pred_region
        %s2152 = ssub.s32 %s24, 2
        // Predicated region
        $region148: #{tpu_custom_call.1} parent=146 // pred_check
          %p2153 = pneg %p273
        $region149: #{tpu_custom_call.1} parent=146 // pred_check_branch
          %2155 = sbr.rel (%p2153) target = $region151
        $region150: #{tpu_custom_call.1} parent=146 // pred_region
          %s2156 = sand.u32 %s258, 1
          %s2157 = scalar_lea.sflag [#allocation5], %s2156
          %s2158 = sand.u32 %s258, 1
          %s2159 = smul.addr %s2158, 32
          %s2160 = scalar_lea.vmem [#allocation4], %s2159
          %2161 = dma.done %s2157, 512
        $region151: #{tpu_custom_call.1} parent=146 // pred_fallthru
          _
        // Predicated region
        $region152: #{tpu_custom_call.1} parent=146 // pred_check
          %p2162 = pneg %p299
        $region153: #{tpu_custom_call.1} parent=146 // pred_check_branch
          %2164 = sbr.rel (%p2162) target = $region155
        $region154: #{tpu_custom_call.1} parent=146 // pred_region
          %s2165 = sand.u32 %s284, 1
          %s2166 = scalar_lea.sflag [#allocation7], %s2165
          %s2167 = sand.u32 %s284, 1
          %s2168 = smul.addr %s2167, 4
          %s2169 = scalar_lea.vmem [#allocation6], %s2168
          %2170 = dma.done %s2166, 64
        $region155: #{tpu_custom_call.1} parent=146 // pred_fallthru
          _
      $region147: #{tpu_custom_call.1} parent=5 // pred_fallthru
        _
    $region6: #{tpu_custom_call.1} parent=1 // loop_footer
      %s28 = sadd.s32 1, %s24
    $region7: #{tpu_custom_call.1} parent=1 // loop_footer_branch
      %23 = sbr.rel target = $region3
    $region8: #{tpu_custom_call.1} parent=1 // loop_exit
      _
    %2171 = vsyncpa [#allocation5], 1
    %s2172 = scalar_lea.sflag [#allocation5], 1
    %2173 = vsyncpa %s2172, 1
    %2174 = vsyncpa [#allocation7], 1
    %s2175 = scalar_lea.sflag [#allocation7], 1
    %2176 = vsyncpa %s2175, 1

</llo_original>
